<compile_context>
chip_gen: v5e
topology: v5e:2x2
jax: 0.10.0
libtpu: 0.0.40
codegen_flags: <defaults>
</compile_context>

<pallas_src>
import jax
import jax.numpy as jnp
from jax.experimental import pallas as pl
from jax.experimental.pallas import tpu as pltpu

LANES = 128              # padded FC hidden width (lane-dense matmuls)
C1PAD = 8                # conv1 out channels 6 -> 8 (narrow full-dim store)
C2OUT = 16               # conv2 out channels (already lane-friendly)
F3PAD = 16               # fc3 out 10 -> 16
TM_MAX = 2048            # M-tile upper bound (fits 32 MiB scoped VMEM, 2x buf)
VMEM_LIMIT = 32 * 1024 * 1024


def _round_up(x, m):
    return (x + m - 1) // m * m


def _cdiv(a, b):
    return -(-a // b)


def _tile_m(M):
    """Pick an M tile that (a) is a multiple of 16, (b) caps at TM_MAX, and
    (c) yields at least 2 grid steps (v7x 2-TensorCore sharding + pipelining)."""
    tm = min(TM_MAX, _round_up(_cdiv(M, 2), 16))
    mpad = max(_round_up(M, tm), 2 * tm)
    return tm, mpad


# ---------------------------------------------------------------------------
# Pallas kernels
# ---------------------------------------------------------------------------
def _conv_relu_pool_kernel(xa_ref, xb_ref, xc_ref, xd_ref, w_ref, b_ref, o_ref):
    """Four pooling-quadrant im2col matmuls (bf16 in, f32 acc), 4-way max,
    then a single bias + relu. Output is the narrow (real-channel) slab."""
    w = w_ref[...]

    def quad(x_ref):
        return jnp.dot(x_ref[...], w, preferred_element_type=jnp.float32)

    m = jnp.maximum(jnp.maximum(quad(xa_ref), quad(xb_ref)),
                    jnp.maximum(quad(xc_ref), quad(xd_ref)))
    o_ref[...] = jnp.maximum(m + b_ref[...], 0.0).astype(o_ref.dtype)


def _mlp_kernel(x_ref, w1_ref, b1_ref, w2_ref, b2_ref, w3_ref, b3_ref, o_ref):
    """fc1 -> relu -> fc2 -> relu -> fc3 fused. bf16 matmul inputs, f32
    accumulation, f32 bias/relu; hiddens re-cast to bf16 between layers."""
    h = jnp.dot(x_ref[...], w1_ref[...], preferred_element_type=jnp.float32)
    h = jnp.maximum(h + b1_ref[...], 0.0).astype(jnp.bfloat16)
    h = jnp.dot(h, w2_ref[...], preferred_element_type=jnp.float32)
    h = jnp.maximum(h + b2_ref[...], 0.0).astype(jnp.bfloat16)
    h = jnp.dot(h, w3_ref[...], preferred_element_type=jnp.float32)
    o_ref[...] = (h + b3_ref[...]).astype(o_ref.dtype)


# ---------------------------------------------------------------------------
# Wrappers
# ---------------------------------------------------------------------------
def conv_relu_pool(x_nhwc, w_packed, b_packed, kh=5, kw=5):
    """x: (N,H,W,Cin) f32. w_packed: (kh*kw*Cin, Cout) bf16. Returns
    (N, PH, PW, Cout) f32 where PH/PW are the pooled spatial dims."""
    N, H, W, Cin = x_nhwc.shape
    PH, PW = (H - kh + 1) // 2, (W - kw + 1) // 2
    K = kh * kw * Cin
    Cout = w_packed.shape[1]
    M = N * PH * PW

    # Build the four 2x2-maxpool quadrants straight from x (no full im2col
    # intermediate); cast to bf16 to halve DMA bytes.
    # TODO(synk): move this extraction in-kernel via manual DMA of NHWC tiles.
    def quad(dy, dx):
        cols = [x_nhwc[:, dy + i: dy + i + 2 * PH: 2,
                        dx + j: dx + j + 2 * PW: 2, :]
                for i in range(kh) for j in range(kw)]
        q = jnp.stack(cols, axis=3).reshape(M, K)
        return q.astype(jnp.bfloat16)

    quads = [quad(dy, dx) for dy in (0, 1) for dx in (0, 1)]

    TM, Mpad = _tile_m(M)
    if Mpad != M:
        quads = [jnp.pad(q, ((0, Mpad - M), (0, 0))) for q in quads]

    out = pl.pallas_call(
        _conv_relu_pool_kernel,
        out_shape=jax.ShapeDtypeStruct((Mpad, Cout), jnp.float32),
        grid=(Mpad // TM,),
        in_specs=[pl.BlockSpec((TM, K), lambda i: (i, 0))] * 4 + [
            pl.BlockSpec((K, Cout), lambda i: (0, 0)),   # VMEM-resident weights
            pl.BlockSpec((1, Cout), lambda i: (0, 0)),   # VMEM-resident bias
        ],
        out_specs=pl.BlockSpec((TM, Cout), lambda i: (i, 0)),
        compiler_params=pltpu.CompilerParams(
            dimension_semantics=("parallel",),
            vmem_limit_bytes=VMEM_LIMIT),
    )(*quads, w_packed, b_packed)
    return out[:M].reshape(N, PH, PW, Cout)


def mlp(x, pk):
    """x: (N, 256) f32 (NHWC-flattened conv2 output) -> logits (N, 10)."""
    N, K = x.shape
    x = x.astype(jnp.bfloat16)
    TM, Mpad = _tile_m(N)
    if Mpad != N:
        x = jnp.pad(x, ((0, Mpad - N), (0, 0)))

    out = pl.pallas_call(
        _mlp_kernel,
        out_shape=jax.ShapeDtypeStruct((Mpad, F3PAD), jnp.float32),
        grid=(Mpad // TM,),
        in_specs=[
            pl.BlockSpec((TM, K), lambda i: (i, 0)),
            pl.BlockSpec((K, LANES), lambda i: (0, 0)),
            pl.BlockSpec((1, LANES), lambda i: (0, 0)),
            pl.BlockSpec((LANES, LANES), lambda i: (0, 0)),
            pl.BlockSpec((1, LANES), lambda i: (0, 0)),
            pl.BlockSpec((LANES, F3PAD), lambda i: (0, 0)),
            pl.BlockSpec((1, F3PAD), lambda i: (0, 0)),
        ],
        out_specs=pl.BlockSpec((TM, F3PAD), lambda i: (i, 0)),
        compiler_params=pltpu.CompilerParams(
            dimension_semantics=("parallel",),
            vmem_limit_bytes=VMEM_LIMIT),
    )(x, pk["fc1_w"], pk["fc1_b"], pk["fc2_w"], pk["fc2_b"],
      pk["fc3_w"], pk["fc3_b"])
    return out[:N, :10]


# ---------------------------------------------------------------------------
# Parameters: torch-layout init + one-time packing for the kernels
# ---------------------------------------------------------------------------
def init_params(key, init_channel=1):
    ks = jax.random.split(key, 10)

    def u(k, shape, fan_in):
        bound = 1.0 / jnp.sqrt(jnp.float32(fan_in))
        return jax.random.uniform(k, shape, jnp.float32, -bound, bound)

    p = {}
    p["conv1_w"] = u(ks[0], (6, init_channel, 5, 5), init_channel * 25)
    p["conv1_b"] = u(ks[1], (6,), init_channel * 25)
    p["conv2_w"] = u(ks[2], (16, 6, 5, 5), 6 * 25)
    p["conv2_b"] = u(ks[3], (16,), 6 * 25)
    p["fc1_w"]   = u(ks[4], (120, 16 * 4 * 4), 16 * 4 * 4)
    p["fc1_b"]   = u(ks[5], (120,), 16 * 4 * 4)
    p["fc2_w"]   = u(ks[6], (84, 120), 120)
    p["fc2_b"]   = u(ks[7], (84,), 120)
    p["fc3_w"]   = u(ks[8], (10, 84), 84)
    p["fc3_b"]   = u(ks[9], (10,), 84)
    return p


def pack_params(p):
    """One-time transpose / pad / permute / bf16-cast to kernel layouts."""
    bf = jnp.bfloat16
    pk = {}

    # conv1: (6,1,5,5) -> (5,5,1,6) -> (25,6) -> pad Cout 6->8, bf16
    w1 = jnp.transpose(p["conv1_w"], (2, 3, 1, 0)).reshape(-1, 6)
    pk["c1_w"] = jnp.pad(w1, ((0, 0), (0, C1PAD - 6))).astype(bf)
    pk["c1_b"] = jnp.pad(p["conv1_b"].reshape(1, -1), ((0, 0), (0, C1PAD - 6)))

    # conv2: (16,6,5,5) -> (5,5,6,16) -> pad Cin 6->8 (zero rows for conv1's
    # padding channels) -> (200,16), bf16
    w2 = jnp.transpose(p["conv2_w"], (2, 3, 1, 0))
    w2 = jnp.pad(w2, ((0, 0), (0, 0), (0, C1PAD - 6), (0, 0)))
    pk["c2_w"] = w2.reshape(5 * 5 * C1PAD, C2OUT).astype(bf)
    pk["c2_b"] = p["conv2_b"].reshape(1, -1)

    # fc1: torch weight indexes the NCHW flatten (c*16 + h*4 + w). Permute
    # rows so the kernel consumes the NHWC flatten (h*64 + w*16 + c) directly.
    k = jnp.arange(16 * 4 * 4)
    h, w, c = k // 64, (k // 16) % 4, k % 16
    perm = c * 16 + h * 4 + w
    w_fc1 = p["fc1_w"].T[perm, :]                                   # (256, 120)
    pk["fc1_w"] = jnp.pad(w_fc1, ((0, 0), (0, LANES - 120))).astype(bf)
    pk["fc1_b"] = jnp.pad(p["fc1_b"].reshape(1, -1), ((0, 0), (0, LANES - 120)))

    pk["fc2_w"] = jnp.pad(p["fc2_w"].T,
                          ((0, LANES - 120), (0, LANES - 84))).astype(bf)
    pk["fc2_b"] = jnp.pad(p["fc2_b"].reshape(1, -1), ((0, 0), (0, LANES - 84)))

    pk["fc3_w"] = jnp.pad(p["fc3_w"].T,
                          ((0, LANES - 84), (0, F3PAD - 10))).astype(bf)
    pk["fc3_b"] = jnp.pad(p["fc3_b"].reshape(1, -1), ((0, 0), (0, F3PAD - 10)))
    return pk


# ---------------------------------------------------------------------------
# Forward
# ---------------------------------------------------------------------------
def net_forward(packed, x_nchw):
    x = jnp.transpose(x_nchw, (0, 2, 3, 1))                   # NCHW -> NHWC
    x = conv_relu_pool(x, packed["c1_w"], packed["c1_b"])      # (N,12,12,8)
    x = conv_relu_pool(x, packed["c2_w"], packed["c2_b"])      # (N, 4, 4,16)
    x = x.reshape(x.shape[0], -1)                              # NHWC flatten
    return mlp(x, packed)                                      # (N, 10)


# ---------------------------------------------------------------------------
# References for correctness checks
# ---------------------------------------------------------------------------
def reference_forward(params, x):
    """Pure-f32, torch-semantics reference (Precision.HIGHEST)."""
    hi = jax.lax.Precision.HIGHEST

    def conv(x, w, b):
        y = jax.lax.conv_general_dilated(
            x, w, (1, 1), "VALID",
            dimension_numbers=("NCHW", "OIHW", "NCHW"), precision=hi)
        return jax.nn.relu(y + b[None, :, None, None])

    def pool(x):
        return jax.lax.reduce_window(
            x, -jnp.inf, jax.lax.max, (1, 1, 2, 2), (1, 1, 2, 2), "VALID")

    x = pool(conv(x, params["conv1_w"], params["conv1_b"]))
    x = pool(conv(x, params["conv2_w"], params["conv2_b"]))
    x = x.reshape(x.shape[0], -1)
    x = jax.nn.relu(jnp.dot(x, params["fc1_w"].T, precision=hi) + params["fc1_b"])
    x = jax.nn.relu(jnp.dot(x, params["fc2_w"].T, precision=hi) + params["fc2_b"])
    return jnp.dot(x, params["fc3_w"].T, precision=hi) + params["fc3_b"]


def reference_forward_bf16(params, x):
    """Reference that quantizes matmul inputs to bf16 at the same points as
    the kernels (f32 accumulation, f32 bias/relu) — tight structural check."""
    bf = jnp.bfloat16

    def conv(x, w, b):
        y = jax.lax.conv_general_dilated(
            x.astype(bf), w.astype(bf), (1, 1), "VALID",
            dimension_numbers=("NCHW", "OIHW", "NCHW"),
            preferred_element_type=jnp.float32)
        return jax.nn.relu(y + b[None, :, None, None])

    def pool(x):
        return jax.lax.reduce_window(
            x, -jnp.inf, jax.lax.max, (1, 1, 2, 2), (1, 1, 2, 2), "VALID")

    def fc(x, w, b):
        return jnp.dot(x.astype(bf), w.T.astype(bf),
                       preferred_element_type=jnp.float32) + b

    x = pool(conv(x, params["conv1_w"], params["conv1_b"]))
    x = pool(conv(x, params["conv2_w"], params["conv2_b"]))
    x = x.reshape(x.shape[0], -1)
    x = jax.nn.relu(fc(x, params["fc1_w"], params["fc1_b"]))
    x = jax.nn.relu(fc(x, params["fc2_w"], params["fc2_b"]))
    return fc(x, params["fc3_w"], params["fc3_b"])


if __name__ == "__main__":
    key = jax.random.PRNGKey(0)
    pkey, xkey = jax.random.split(key)
    params = init_params(pkey, init_channel=1)
    packed = pack_params(params)

    # Input shape implied by fc1 = Linear(16*4*4, ...): (N, 1, 28, 28)
    x = jax.random.normal(xkey, (2, 1, 28, 28), dtype=jnp.float32)

    out = jax.block_until_ready(jax.jit(net_forward)(packed, x))
    assert out.shape == (2, 10), out.shape

    # Tight check vs bf16-quantization-matched reference (kernel logic).
    ref_q = jax.block_until_ready(reference_forward_bf16(params, x))
    assert jnp.allclose(out, ref_q, rtol=1e-3, atol=1e-3), \
        f"max abs err vs bf16 ref {jnp.max(jnp.abs(out - ref_q))}"

    # Sanity check vs pure-f32 torch-semantics reference (tolerance sized for
    # bf16 matmul inputs).
    ref = jax.block_until_ready(reference_forward(params, x))
    assert jnp.allclose(out, ref, rtol=5e-2, atol=5e-2), \
        f"max abs err vs f32 ref {jnp.max(jnp.abs(out - ref))}"

    print("KERNEL_OK")
</pallas_src>

<mosaic_0001>
module attributes {stable_mosaic.version = 11 : i64} {
  func.func @_conv_relu_pool_kernel(%arg0: i32, %arg1: memref<144x25xbf16, #tpu.memory_space<vmem>>, %arg2: memref<144x25xbf16, #tpu.memory_space<vmem>>, %arg3: memref<144x25xbf16, #tpu.memory_space<vmem>>, %arg4: memref<144x25xbf16, #tpu.memory_space<vmem>>, %arg5: memref<25x8xbf16, #tpu.memory_space<vmem>>, %arg6: memref<1x8xf32, #tpu.memory_space<vmem>>, %arg7: memref<144x8xf32, #tpu.memory_space<vmem>>) attributes {dimension_semantics = [#tpu.dimension_semantics<parallel>], iteration_bounds = array<i64: 2>, scalar_prefetch = 0 : i64, scratch_operands = 0 : i64, tpu.core_type = #tpu.core_type<tc>, window_params = [{transform_indices = @transform_0, window_bounds = array<i64: 144, 25>}, {transform_indices = @transform_1, window_bounds = array<i64: 144, 25>}, {transform_indices = @transform_2, window_bounds = array<i64: 144, 25>}, {transform_indices = @transform_3, window_bounds = array<i64: 144, 25>}, {pipeline_mode = #tpu.pipeline_mode<synchronous>, transform_indices = @transform_4, window_bounds = array<i64: 25, 8>}, {pipeline_mode = #tpu.pipeline_mode<synchronous>, transform_indices = @transform_5, window_bounds = array<i64: 1, 8>}, {transform_indices = @transform_6, window_bounds = array<i64: 144, 8>}]} {
    %c0 = arith.constant 0 : index
    %c0_0 = arith.constant 0 : index
    %0 = vector.load %arg5[%c0, %c0_0] : memref<25x8xbf16, #tpu.memory_space<vmem>>, vector<25x8xbf16>
    %c0_1 = arith.constant 0 : index
    %c0_2 = arith.constant 0 : index
    %1 = vector.load %arg1[%c0_1, %c0_2] : memref<144x25xbf16, #tpu.memory_space<vmem>>, vector<144x25xbf16>
    %cst = arith.constant dense<0.000000e+00> : vector<144x8xf32>
    %2 = tpu.matmul %1, %0, %cst {dimension_numbers = #tpu.dot_dimension_numbers<[1], [0], [0], [1], [0, 0, 1, 1], [], []>} : vector<144x25xbf16>, vector<25x8xbf16>, vector<144x8xf32> -> vector<144x8xf32>
    %c0_3 = arith.constant 0 : index
    %c0_4 = arith.constant 0 : index
    %3 = vector.load %arg2[%c0_3, %c0_4] : memref<144x25xbf16, #tpu.memory_space<vmem>>, vector<144x25xbf16>
    %cst_5 = arith.constant dense<0.000000e+00> : vector<144x8xf32>
    %4 = tpu.matmul %3, %0, %cst_5 {dimension_numbers = #tpu.dot_dimension_numbers<[1], [0], [0], [1], [0, 0, 1, 1], [], []>} : vector<144x25xbf16>, vector<25x8xbf16>, vector<144x8xf32> -> vector<144x8xf32>
    %5 = arith.maximumf %2, %4 : vector<144x8xf32>
    %c0_6 = arith.constant 0 : index
    %c0_7 = arith.constant 0 : index
    %6 = vector.load %arg3[%c0_6, %c0_7] : memref<144x25xbf16, #tpu.memory_space<vmem>>, vector<144x25xbf16>
    %cst_8 = arith.constant dense<0.000000e+00> : vector<144x8xf32>
    %7 = tpu.matmul %6, %0, %cst_8 {dimension_numbers = #tpu.dot_dimension_numbers<[1], [0], [0], [1], [0, 0, 1, 1], [], []>} : vector<144x25xbf16>, vector<25x8xbf16>, vector<144x8xf32> -> vector<144x8xf32>
    %c0_9 = arith.constant 0 : index
    %c0_10 = arith.constant 0 : index
    %8 = vector.load %arg4[%c0_9, %c0_10] : memref<144x25xbf16, #tpu.memory_space<vmem>>, vector<144x25xbf16>
    %cst_11 = arith.constant dense<0.000000e+00> : vector<144x8xf32>
    %9 = tpu.matmul %8, %0, %cst_11 {dimension_numbers = #tpu.dot_dimension_numbers<[1], [0], [0], [1], [0, 0, 1, 1], [], []>} : vector<144x25xbf16>, vector<25x8xbf16>, vector<144x8xf32> -> vector<144x8xf32>
    %10 = arith.maximumf %7, %9 : vector<144x8xf32>
    %11 = arith.maximumf %5, %10 : vector<144x8xf32>
    %c0_12 = arith.constant 0 : index
    %c0_13 = arith.constant 0 : index
    %12 = vector.load %arg6[%c0_12, %c0_13] : memref<1x8xf32, #tpu.memory_space<vmem>>, vector<1x8xf32>
    %13 = vector.broadcast %12 : vector<1x8xf32> to vector<144x8xf32>
    %14 = arith.addf %11, %13 : vector<144x8xf32>
    %cst_14 = arith.constant 0.000000e+00 : f32
    %15 = vector.broadcast %cst_14 : f32 to vector<144x8xf32>
    %16 = arith.maximumf %14, %15 : vector<144x8xf32>
    %c0_15 = arith.constant 0 : index
    %c0_16 = arith.constant 0 : index
    %17 = vector.load %arg7[%c0_15, %c0_16] : memref<144x8xf32, #tpu.memory_space<vmem>>, vector<144x8xf32>
    tpu.vector_store %arg7[%c0_15, %c0_16], %16 {strides = array<i32>} : memref<144x8xf32, #tpu.memory_space<vmem>>, vector<144x8xf32>,
    return
  }
  func.func @transform_0(%arg0: i32) -> (i32, i32) {
    %c0_i32 = arith.constant 0 : i32
    %c0_i32_0 = arith.constant 0 : i32
    return %arg0, %c0_i32 : i32, i32
  }
  func.func @transform_1(%arg0: i32) -> (i32, i32) {
    %c0_i32 = arith.constant 0 : i32
    %c0_i32_0 = arith.constant 0 : i32
    return %arg0, %c0_i32 : i32, i32
  }
  func.func @transform_2(%arg0: i32) -> (i32, i32) {
    %c0_i32 = arith.constant 0 : i32
    %c0_i32_0 = arith.constant 0 : i32
    return %arg0, %c0_i32 : i32, i32
  }
  func.func @transform_3(%arg0: i32) -> (i32, i32) {
    %c0_i32 = arith.constant 0 : i32
    %c0_i32_0 = arith.constant 0 : i32
    return %arg0, %c0_i32 : i32, i32
  }
  func.func @transform_4(%arg0: i32) -> (i32, i32) {
    %c0_i32 = arith.constant 0 : i32
    %c0_i32_0 = arith.constant 0 : i32
    %c0_i32_1 = arith.constant 0 : i32
    return %c0_i32, %c0_i32_0 : i32, i32
  }
  func.func @transform_5(%arg0: i32) -> (i32, i32) {
    %c0_i32 = arith.constant 0 : i32
    %c0_i32_0 = arith.constant 0 : i32
    %c0_i32_1 = arith.constant 0 : i32
    return %c0_i32, %c0_i32_0 : i32, i32
  }
  func.func @transform_6(%arg0: i32) -> (i32, i32) {
    %c0_i32 = arith.constant 0 : i32
    %c0_i32_0 = arith.constant 0 : i32
    return %arg0, %c0_i32 : i32, i32
  }
}

module attributes {stable_mosaic.version = 11 : i64} {
  func.func @_conv_relu_pool_kernel(%arg0: i32, %arg1: memref<16x200xbf16, #tpu.memory_space<vmem>>, %arg2: memref<16x200xbf16, #tpu.memory_space<vmem>>, %arg3: memref<16x200xbf16, #tpu.memory_space<vmem>>, %arg4: memref<16x200xbf16, #tpu.memory_space<vmem>>, %arg5: memref<200x16xbf16, #tpu.memory_space<vmem>>, %arg6: memref<1x16xf32, #tpu.memory_space<vmem>>, %arg7: memref<16x16xf32, #tpu.memory_space<vmem>>) attributes {dimension_semantics = [#tpu.dimension_semantics<parallel>], iteration_bounds = array<i64: 2>, scalar_prefetch = 0 : i64, scratch_operands = 0 : i64, tpu.core_type = #tpu.core_type<tc>, window_params = [{transform_indices = @transform_0, window_bounds = array<i64: 16, 200>}, {transform_indices = @transform_1, window_bounds = array<i64: 16, 200>}, {transform_indices = @transform_2, window_bounds = array<i64: 16, 200>}, {transform_indices = @transform_3, window_bounds = array<i64: 16, 200>}, {pipeline_mode = #tpu.pipeline_mode<synchronous>, transform_indices = @transform_4, window_bounds = array<i64: 200, 16>}, {pipeline_mode = #tpu.pipeline_mode<synchronous>, transform_indices = @transform_5, window_bounds = array<i64: 1, 16>}, {transform_indices = @transform_6, window_bounds = array<i64: 16, 16>}]} {
    %c0 = arith.constant 0 : index
    %c0_0 = arith.constant 0 : index
    %0 = vector.load %arg5[%c0, %c0_0] : memref<200x16xbf16, #tpu.memory_space<vmem>>, vector<200x16xbf16>
    %c0_1 = arith.constant 0 : index
    %c0_2 = arith.constant 0 : index
    %1 = vector.load %arg1[%c0_1, %c0_2] : memref<16x200xbf16, #tpu.memory_space<vmem>>, vector<16x200xbf16>
    %cst = arith.constant dense<0.000000e+00> : vector<16x16xf32>
    %2 = tpu.matmul %1, %0, %cst {dimension_numbers = #tpu.dot_dimension_numbers<[1], [0], [0], [1], [0, 0, 1, 1], [], []>} : vector<16x200xbf16>, vector<200x16xbf16>, vector<16x16xf32> -> vector<16x16xf32>
    %c0_3 = arith.constant 0 : index
    %c0_4 = arith.constant 0 : index
    %3 = vector.load %arg2[%c0_3, %c0_4] : memref<16x200xbf16, #tpu.memory_space<vmem>>, vector<16x200xbf16>
    %cst_5 = arith.constant dense<0.000000e+00> : vector<16x16xf32>
    %4 = tpu.matmul %3, %0, %cst_5 {dimension_numbers = #tpu.dot_dimension_numbers<[1], [0], [0], [1], [0, 0, 1, 1], [], []>} : vector<16x200xbf16>, vector<200x16xbf16>, vector<16x16xf32> -> vector<16x16xf32>
    %5 = arith.maximumf %2, %4 : vector<16x16xf32>
    %c0_6 = arith.constant 0 : index
    %c0_7 = arith.constant 0 : index
    %6 = vector.load %arg3[%c0_6, %c0_7] : memref<16x200xbf16, #tpu.memory_space<vmem>>, vector<16x200xbf16>
    %cst_8 = arith.constant dense<0.000000e+00> : vector<16x16xf32>
    %7 = tpu.matmul %6, %0, %cst_8 {dimension_numbers = #tpu.dot_dimension_numbers<[1], [0], [0], [1], [0, 0, 1, 1], [], []>} : vector<16x200xbf16>, vector<200x16xbf16>, vector<16x16xf32> -> vector<16x16xf32>
    %c0_9 = arith.constant 0 : index
    %c0_10 = arith.constant 0 : index
    %8 = vector.load %arg4[%c0_9, %c0_10] : memref<16x200xbf16, #tpu.memory_space<vmem>>, vector<16x200xbf16>
    %cst_11 = arith.constant dense<0.000000e+00> : vector<16x16xf32>
    %9 = tpu.matmul %8, %0, %cst_11 {dimension_numbers = #tpu.dot_dimension_numbers<[1], [0], [0], [1], [0, 0, 1, 1], [], []>} : vector<16x200xbf16>, vector<200x16xbf16>, vector<16x16xf32> -> vector<16x16xf32>
    %10 = arith.maximumf %7, %9 : vector<16x16xf32>
    %11 = arith.maximumf %5, %10 : vector<16x16xf32>
    %c0_12 = arith.constant 0 : index
    %c0_13 = arith.constant 0 : index
    %12 = vector.load %arg6[%c0_12, %c0_13] : memref<1x16xf32, #tpu.memory_space<vmem>>, vector<1x16xf32>
    %13 = vector.broadcast %12 : vector<1x16xf32> to vector<16x16xf32>
    %14 = arith.addf %11, %13 : vector<16x16xf32>
    %cst_14 = arith.constant 0.000000e+00 : f32
    %15 = vector.broadcast %cst_14 : f32 to vector<16x16xf32>
    %16 = arith.maximumf %14, %15 : vector<16x16xf32>
    %c0_15 = arith.constant 0 : index
    %c0_16 = arith.constant 0 : index
    %17 = vector.load %arg7[%c0_15, %c0_16] : memref<16x16xf32, #tpu.memory_space<vmem>>, vector<16x16xf32>
    tpu.vector_store %arg7[%c0_15, %c0_16], %16 {strides = array<i32>} : memref<16x16xf32, #tpu.memory_space<vmem>>, vector<16x16xf32>,
    return
  }
  func.func @transform_0(%arg0: i32) -> (i32, i32) {
    %c0_i32 = arith.constant 0 : i32
    %c0_i32_0 = arith.constant 0 : i32
    return %arg0, %c0_i32 : i32, i32
  }
  func.func @transform_1(%arg0: i32) -> (i32, i32) {
    %c0_i32 = arith.constant 0 : i32
    %c0_i32_0 = arith.constant 0 : i32
    return %arg0, %c0_i32 : i32, i32
  }
  func.func @transform_2(%arg0: i32) -> (i32, i32) {
    %c0_i32 = arith.constant 0 : i32
    %c0_i32_0 = arith.constant 0 : i32
    return %arg0, %c0_i32 : i32, i32
  }
  func.func @transform_3(%arg0: i32) -> (i32, i32) {
    %c0_i32 = arith.constant 0 : i32
    %c0_i32_0 = arith.constant 0 : i32
    return %arg0, %c0_i32 : i32, i32
  }
  func.func @transform_4(%arg0: i32) -> (i32, i32) {
    %c0_i32 = arith.constant 0 : i32
    %c0_i32_0 = arith.constant 0 : i32
    %c0_i32_1 = arith.constant 0 : i32
    return %c0_i32, %c0_i32_0 : i32, i32
  }
  func.func @transform_5(%arg0: i32) -> (i32, i32) {
    %c0_i32 = arith.constant 0 : i32
    %c0_i32_0 = arith.constant 0 : i32
    %c0_i32_1 = arith.constant 0 : i32
    return %c0_i32, %c0_i32_0 : i32, i32
  }
  func.func @transform_6(%arg0: i32) -> (i32, i32) {
    %c0_i32 = arith.constant 0 : i32
    %c0_i32_0 = arith.constant 0 : i32
    return %arg0, %c0_i32 : i32, i32
  }
}

module attributes {stable_mosaic.version = 11 : i64} {
  func.func @_mlp_kernel(%arg0: i32, %arg1: memref<16x256xbf16, #tpu.memory_space<vmem>>, %arg2: memref<256x128xbf16, #tpu.memory_space<vmem>>, %arg3: memref<1x128xf32, #tpu.memory_space<vmem>>, %arg4: memref<128x128xbf16, #tpu.memory_space<vmem>>, %arg5: memref<1x128xf32, #tpu.memory_space<vmem>>, %arg6: memref<128x16xbf16, #tpu.memory_space<vmem>>, %arg7: memref<1x16xf32, #tpu.memory_space<vmem>>, %arg8: memref<16x16xf32, #tpu.memory_space<vmem>>) attributes {dimension_semantics = [#tpu.dimension_semantics<parallel>], iteration_bounds = array<i64: 2>, scalar_prefetch = 0 : i64, scratch_operands = 0 : i64, tpu.core_type = #tpu.core_type<tc>, window_params = [{transform_indices = @transform_0, window_bounds = array<i64: 16, 256>}, {pipeline_mode = #tpu.pipeline_mode<synchronous>, transform_indices = @transform_1, window_bounds = array<i64: 256, 128>}, {pipeline_mode = #tpu.pipeline_mode<synchronous>, transform_indices = @transform_2, window_bounds = array<i64: 1, 128>}, {pipeline_mode = #tpu.pipeline_mode<synchronous>, transform_indices = @transform_3, window_bounds = array<i64: 128, 128>}, {pipeline_mode = #tpu.pipeline_mode<synchronous>, transform_indices = @transform_4, window_bounds = array<i64: 1, 128>}, {pipeline_mode = #tpu.pipeline_mode<synchronous>, transform_indices = @transform_5, window_bounds = array<i64: 128, 16>}, {pipeline_mode = #tpu.pipeline_mode<synchronous>, transform_indices = @transform_6, window_bounds = array<i64: 1, 16>}, {transform_indices = @transform_7, window_bounds = array<i64: 16, 16>}]} {
    %c0 = arith.constant 0 : index
    %c0_0 = arith.constant 0 : index
    %0 = vector.load %arg1[%c0, %c0_0] : memref<16x256xbf16, #tpu.memory_space<vmem>>, vector<16x256xbf16>
    %c0_1 = arith.constant 0 : index
    %c0_2 = arith.constant 0 : index
    %1 = vector.load %arg2[%c0_1, %c0_2] : memref<256x128xbf16, #tpu.memory_space<vmem>>, vector<256x128xbf16>
    %cst = arith.constant dense<0.000000e+00> : vector<16x128xf32>
    %2 = tpu.matmul %0, %1, %cst {dimension_numbers = #tpu.dot_dimension_numbers<[1], [0], [0], [1], [0, 0, 1, 1], [], []>} : vector<16x256xbf16>, vector<256x128xbf16>, vector<16x128xf32> -> vector<16x128xf32>
    %c0_3 = arith.constant 0 : index
    %c0_4 = arith.constant 0 : index
    %3 = vector.load %arg3[%c0_3, %c0_4] : memref<1x128xf32, #tpu.memory_space<vmem>>, vector<1x128xf32>
    %4 = vector.broadcast %3 : vector<1x128xf32> to vector<16x128xf32>
    %5 = arith.addf %2, %4 : vector<16x128xf32>
    %cst_5 = arith.constant 0.000000e+00 : f32
    %6 = vector.broadcast %cst_5 : f32 to vector<16x128xf32>
    %7 = arith.maximumf %5, %6 : vector<16x128xf32>
    %8 = arith.truncf %7 : vector<16x128xf32> to vector<16x128xbf16>
    %c0_6 = arith.constant 0 : index
    %c0_7 = arith.constant 0 : index
    %9 = vector.load %arg4[%c0_6, %c0_7] : memref<128x128xbf16, #tpu.memory_space<vmem>>, vector<128x128xbf16>
    %cst_8 = arith.constant dense<0.000000e+00> : vector<16x128xf32>
    %10 = tpu.matmul %8, %9, %cst_8 {dimension_numbers = #tpu.dot_dimension_numbers<[1], [0], [0], [1], [0, 0, 1, 1], [], []>} : vector<16x128xbf16>, vector<128x128xbf16>, vector<16x128xf32> -> vector<16x128xf32>
    %c0_9 = arith.constant 0 : index
    %c0_10 = arith.constant 0 : index
    %11 = vector.load %arg5[%c0_9, %c0_10] : memref<1x128xf32, #tpu.memory_space<vmem>>, vector<1x128xf32>
    %12 = vector.broadcast %11 : vector<1x128xf32> to vector<16x128xf32>
    %13 = arith.addf %10, %12 : vector<16x128xf32>
    %cst_11 = arith.constant 0.000000e+00 : f32
    %14 = vector.broadcast %cst_11 : f32 to vector<16x128xf32>
    %15 = arith.maximumf %13, %14 : vector<16x128xf32>
    %16 = arith.truncf %15 : vector<16x128xf32> to vector<16x128xbf16>
    %c0_12 = arith.constant 0 : index
    %c0_13 = arith.constant 0 : index
    %17 = vector.load %arg6[%c0_12, %c0_13] : memref<128x16xbf16, #tpu.memory_space<vmem>>, vector<128x16xbf16>
    %cst_14 = arith.constant dense<0.000000e+00> : vector<16x16xf32>
    %18 = tpu.matmul %16, %17, %cst_14 {dimension_numbers = #tpu.dot_dimension_numbers<[1], [0], [0], [1], [0, 0, 1, 1], [], []>} : vector<16x128xbf16>, vector<128x16xbf16>, vector<16x16xf32> -> vector<16x16xf32>
    %c0_15 = arith.constant 0 : index
    %c0_16 = arith.constant 0 : index
    %19 = vector.load %arg7[%c0_15, %c0_16] : memref<1x16xf32, #tpu.memory_space<vmem>>, vector<1x16xf32>
    %20 = vector.broadcast %19 : vector<1x16xf32> to vector<16x16xf32>
    %21 = arith.addf %18, %20 : vector<16x16xf32>
    %c0_17 = arith.constant 0 : index
    %c0_18 = arith.constant 0 : index
    %22 = vector.load %arg8[%c0_17, %c0_18] : memref<16x16xf32, #tpu.memory_space<vmem>>, vector<16x16xf32>
    tpu.vector_store %arg8[%c0_17, %c0_18], %21 {strides = array<i32>} : memref<16x16xf32, #tpu.memory_space<vmem>>, vector<16x16xf32>,
    return
  }
  func.func @transform_0(%arg0: i32) -> (i32, i32) {
    %c0_i32 = arith.constant 0 : i32
    %c0_i32_0 = arith.constant 0 : i32
    return %arg0, %c0_i32 : i32, i32
  }
  func.func @transform_1(%arg0: i32) -> (i32, i32) {
    %c0_i32 = arith.constant 0 : i32
    %c0_i32_0 = arith.constant 0 : i32
    %c0_i32_1 = arith.constant 0 : i32
    return %c0_i32, %c0_i32_0 : i32, i32
  }
  func.func @transform_2(%arg0: i32) -> (i32, i32) {
    %c0_i32 = arith.constant 0 : i32
    %c0_i32_0 = arith.constant 0 : i32
    %c0_i32_1 = arith.constant 0 : i32
    return %c0_i32, %c0_i32_0 : i32, i32
  }
  func.func @transform_3(%arg0: i32) -> (i32, i32) {
    %c0_i32 = arith.constant 0 : i32
    %c0_i32_0 = arith.constant 0 : i32
    %c0_i32_1 = arith.constant 0 : i32
    return %c0_i32, %c0_i32_0 : i32, i32
  }
  func.func @transform_4(%arg0: i32) -> (i32, i32) {
    %c0_i32 = arith.constant 0 : i32
    %c0_i32_0 = arith.constant 0 : i32
    %c0_i32_1 = arith.constant 0 : i32
    return %c0_i32, %c0_i32_0 : i32, i32
  }
  func.func @transform_5(%arg0: i32) -> (i32, i32) {
    %c0_i32 = arith.constant 0 : i32
    %c0_i32_0 = arith.constant 0 : i32
    %c0_i32_1 = arith.constant 0 : i32
    return %c0_i32, %c0_i32_0 : i32, i32
  }
  func.func @transform_6(%arg0: i32) -> (i32, i32) {
    %c0_i32 = arith.constant 0 : i32
    %c0_i32_0 = arith.constant 0 : i32
    %c0_i32_1 = arith.constant 0 : i32
    return %c0_i32, %c0_i32_0 : i32, i32
  }
  func.func @transform_7(%arg0: i32) -> (i32, i32) {
    %c0_i32 = arith.constant 0 : i32
    %c0_i32_0 = arith.constant 0 : i32
    return %arg0, %c0_i32 : i32, i32
  }
}

</mosaic_0001>

<llo_original>
// kernel: net_forward.3
$region0: #{net_forward.3}
  #allocation0 [shape = 'u32[]', space=smem, size = 0x4, offset = 0x4, fixed_abs, tag = 'smem constant byte address 0x4 - core index']
  #allocation1 [shape = 'u32[72,128]{1,0:T(1,128)}', space=vmem, size = 0x9000, scoped, tag = 'internal scratch']
  %s0 = inlined_call_operand.vmem [shape: bf16[288,25], index: 0, kind: input, shape index: {}]
  %s1 = inlined_call_operand.vmem [shape: bf16[288,25], index: 1, kind: input, shape index: {}]
  %s2 = inlined_call_operand.vmem [shape: bf16[288,25], index: 2, kind: input, shape index: {}]
  %s3 = inlined_call_operand.vmem [shape: bf16[288,25], index: 3, kind: input, shape index: {}]
  %s4 = inlined_call_operand.vmem [shape: bf16[25,8], index: 4, kind: input, shape index: {}]
  %s5 = inlined_call_operand.vmem [shape: f32[1,8], index: 5, kind: input, shape index: {}]
  %s6 = inlined_call_operand.vmem [shape: f32[288,8], index: 6, kind: output, shape index: {}]
  %s7 = sld [smem:[#allocation0]]
  $region57: #{net_forward.3} parent=0
    _
  %s9 = ssub.s32 1, %s7
  %s10 = scalar_select 0, %s9, %s7
  loop: start=0, step=1, limit=4
  $region2: #{net_forward.3} parent=0 // loop_pre_header
    _
  $region3: #{net_forward.3} parent=0 // loop_header
    %s12 = sphi 0, %s16
    %p13 = scmp.ge.s32.totalorder %s12, 4
    %s22 = sphi 0, %s24
    %s25 = sphi 0, %s22
    %s26 = sphi 0, %s25
    %s42 = sphi 0, %s26
    %s48 = sphi 0, %s50
    %s51 = sphi 0, %s48
    %s52 = sphi 0, %s51
    %s68 = sphi 0, %s52
    %s74 = sphi 0, %s76
    %s77 = sphi 0, %s74
    %s78 = sphi 0, %s77
    %s94 = sphi 0, %s78
    %s100 = sphi 0, %s102
    %s103 = sphi 0, %s100
    %s104 = sphi 0, %s103
    %s120 = sphi 0, %s104
    %s124 = sphi 0, %s124
    %s126 = sphi 0, %s124
    %s127 = sphi 0, %s126
    %s141 = sphi 0, %s127
    %s145 = sphi 0, %s145
    %s147 = sphi 0, %s145
    %s148 = sphi 0, %s147
    %s162 = sphi 0, %s148
    %s168 = sphi 0, %s170
    %s171 = sphi 0, %s168
    %s172 = sphi 0, %s171
    %s188 = sphi 0, %s172
  $region4: #{net_forward.3} parent=0 // loop_header_branch
    %15 = sbr.rel (%p13) target = $region8
  $region5: #{net_forward.3} parent=0 // loop_body
    %s17 = ssub.s32 %s12, 1
    %s18 = ssub.s32 %s12, 2
    %s19 = sadd.s32 %s12, 1
    %s20 = ssub.s32 %s12, %s19
    %p21 = scmp.eq.s32.totalorder %s20, 0
    %s23 = sadd.s32 %s22, 1
    %s24 = scalar_select %p21, %s22, %s23
    %p27 = pneg %p21
    %p28 = scmp.eq.s32.totalorder %s12, 1
    %p29 = por %p27, %p28
    %p30 = scmp.ne.s32.totalorder %s22, %s25
    %p31 = scmp.eq.s32.totalorder %s12, 0
    %p32 = por %p30, %p31
    %p33 = scmp.ne.s32.totalorder %s22, %s25
    %p34 = scmp.eq.s32.totalorder %s17, 1
    %p35 = por %p33, %p34
    %p36 = scmp.ne.s32.totalorder %s25, %s26
    %p37 = scmp.eq.s32.totalorder %s17, 0
    %p38 = por %p36, %p37
    %p39 = scmp.ne.s32.totalorder %s25, %s26
    %p40 = scmp.eq.s32.totalorder %s18, 1
    %p41 = por %p39, %p40
    %p43 = scmp.ne.s32.totalorder %s26, %s42
    %p44 = scmp.eq.s32.totalorder %s18, 0
    %p45 = por %p43, %p44
    %s46 = ssub.s32 %s12, %s19
    %p47 = scmp.eq.s32.totalorder %s46, 0
    %s49 = sadd.s32 %s48, 1
    %s50 = scalar_select %p47, %s48, %s49
    %p53 = pneg %p47
    %p54 = scmp.eq.s32.totalorder %s12, 1
    %p55 = por %p53, %p54
    %p56 = scmp.ne.s32.totalorder %s48, %s51
    %p57 = scmp.eq.s32.totalorder %s12, 0
    %p58 = por %p56, %p57
    %p59 = scmp.ne.s32.totalorder %s48, %s51
    %p60 = scmp.eq.s32.totalorder %s17, 1
    %p61 = por %p59, %p60
    %p62 = scmp.ne.s32.totalorder %s51, %s52
    %p63 = scmp.eq.s32.totalorder %s17, 0
    %p64 = por %p62, %p63
    %p65 = scmp.ne.s32.totalorder %s51, %s52
    %p66 = scmp.eq.s32.totalorder %s18, 1
    %p67 = por %p65, %p66
    %p69 = scmp.ne.s32.totalorder %s52, %s68
    %p70 = scmp.eq.s32.totalorder %s18, 0
    %p71 = por %p69, %p70
    %s72 = ssub.s32 %s12, %s19
    %p73 = scmp.eq.s32.totalorder %s72, 0
    %s75 = sadd.s32 %s74, 1
    %s76 = scalar_select %p73, %s74, %s75
    %p79 = pneg %p73
    %p80 = scmp.eq.s32.totalorder %s12, 1
    %p81 = por %p79, %p80
    %p82 = scmp.ne.s32.totalorder %s74, %s77
    %p83 = scmp.eq.s32.totalorder %s12, 0
    %p84 = por %p82, %p83
    %p85 = scmp.ne.s32.totalorder %s74, %s77
    %p86 = scmp.eq.s32.totalorder %s17, 1
    %p87 = por %p85, %p86
    %p88 = scmp.ne.s32.totalorder %s77, %s78
    %p89 = scmp.eq.s32.totalorder %s17, 0
    %p90 = por %p88, %p89
    %p91 = scmp.ne.s32.totalorder %s77, %s78
    %p92 = scmp.eq.s32.totalorder %s18, 1
    %p93 = por %p91, %p92
    %p95 = scmp.ne.s32.totalorder %s78, %s94
    %p96 = scmp.eq.s32.totalorder %s18, 0
    %p97 = por %p95, %p96
    %s98 = ssub.s32 %s12, %s19
    %p99 = scmp.eq.s32.totalorder %s98, 0
    %s101 = sadd.s32 %s100, 1
    %s102 = scalar_select %p99, %s100, %s101
    %p105 = pneg %p99
    %p106 = scmp.eq.s32.totalorder %s12, 1
    %p107 = por %p105, %p106
    %p108 = scmp.ne.s32.totalorder %s100, %s103
    %p109 = scmp.eq.s32.totalorder %s12, 0
    %p110 = por %p108, %p109
    %p111 = scmp.ne.s32.totalorder %s100, %s103
    %p112 = scmp.eq.s32.totalorder %s17, 1
    %p113 = por %p111, %p112
    %p114 = scmp.ne.s32.totalorder %s103, %s104
    %p115 = scmp.eq.s32.totalorder %s17, 0
    %p116 = por %p114, %p115
    %p117 = scmp.ne.s32.totalorder %s103, %s104
    %p118 = scmp.eq.s32.totalorder %s18, 1
    %p119 = por %p117, %p118
    %p121 = scmp.ne.s32.totalorder %s104, %s120
    %p122 = scmp.eq.s32.totalorder %s18, 0
    %p123 = por %p121, %p122
    %s125 = sadd.s32 %s124, 1
    %p128 = scmp.eq.s32.totalorder %s12, 1
    %p129 = scmp.ne.s32.totalorder %s124, %s126
    %p130 = scmp.eq.s32.totalorder %s12, 0
    %p131 = por %p129, %p130
    %p132 = scmp.ne.s32.totalorder %s124, %s126
    %p133 = scmp.eq.s32.totalorder %s17, 1
    %p134 = por %p132, %p133
    %p135 = scmp.ne.s32.totalorder %s126, %s127
    %p136 = scmp.eq.s32.totalorder %s17, 0
    %p137 = por %p135, %p136
    %p138 = scmp.ne.s32.totalorder %s126, %s127
    %p139 = scmp.eq.s32.totalorder %s18, 1
    %p140 = por %p138, %p139
    %p142 = scmp.ne.s32.totalorder %s127, %s141
    %p143 = scmp.eq.s32.totalorder %s18, 0
    %p144 = por %p142, %p143
    %s146 = sadd.s32 %s145, 1
    %p149 = scmp.eq.s32.totalorder %s12, 1
    %p150 = scmp.ne.s32.totalorder %s145, %s147
    %p151 = scmp.eq.s32.totalorder %s12, 0
    %p152 = por %p150, %p151
    %p153 = scmp.ne.s32.totalorder %s145, %s147
    %p154 = scmp.eq.s32.totalorder %s17, 1
    %p155 = por %p153, %p154
    %p156 = scmp.ne.s32.totalorder %s147, %s148
    %p157 = scmp.eq.s32.totalorder %s17, 0
    %p158 = por %p156, %p157
    %p159 = scmp.ne.s32.totalorder %s147, %s148
    %p160 = scmp.eq.s32.totalorder %s18, 1
    %p161 = por %p159, %p160
    %p163 = scmp.ne.s32.totalorder %s148, %s162
    %p164 = scmp.eq.s32.totalorder %s18, 0
    %p165 = por %p163, %p164
    %s166 = ssub.s32 %s12, %s19
    %p167 = scmp.eq.s32.totalorder %s166, 0
    %s169 = sadd.s32 %s168, 1
    %s170 = scalar_select %p167, %s168, %s169
    %p173 = pneg %p167
    %p174 = scmp.eq.s32.totalorder %s12, 1
    %p175 = por %p173, %p174
    %p176 = scmp.ne.s32.totalorder %s168, %s171
    %p177 = scmp.eq.s32.totalorder %s12, 0
    %p178 = por %p176, %p177
    %p179 = scmp.ne.s32.totalorder %s168, %s171
    %p180 = scmp.eq.s32.totalorder %s17, 1
    %p181 = por %p179, %p180
    %p182 = scmp.ne.s32.totalorder %s171, %s172
    %p183 = scmp.eq.s32.totalorder %s17, 0
    %p184 = por %p182, %p183
    %p185 = scmp.ne.s32.totalorder %s171, %s172
    %p186 = scmp.eq.s32.totalorder %s18, 1
    %p187 = por %p185, %p186
    %p189 = scmp.ne.s32.totalorder %s172, %s188
    %p190 = scmp.eq.s32.totalorder %s18, 0
    %p191 = por %p189, %p190
    %p192 = scmp.le.s32.totalorder 1, %s12
    %p193 = scmp.lt.s32.totalorder %s12, 3
    %p194 = pnand %p192, %p193
    %p195 = pneg %p194
    // Predicated region
    $region9: #{net_forward.3} parent=5 // pred_check
      _
    $region10: #{net_forward.3} parent=5 // pred_check_branch
      %197 = sbr.rel (%p194) target = $region12
    $region11: #{net_forward.3} parent=5 // pred_region
      %s198 = ssub.s32 %s12, 1
      // Predicated region
      $region13: #{net_forward.3} parent=11 // pred_check
        %p199 = pneg %p137
      $region14: #{net_forward.3} parent=11 // pred_check_branch
        %201 = sbr.rel (%p199) target = $region16
      $region15: #{net_forward.3} parent=11 // pred_region
        _
      $region16: #{net_forward.3} parent=11 // pred_fallthru
        _
      // Predicated region
      $region17: #{net_forward.3} parent=11 // pred_check
        %p202 = pneg %p158
      $region18: #{net_forward.3} parent=11 // pred_check_branch
        %204 = sbr.rel (%p202) target = $region20
      $region19: #{net_forward.3} parent=11 // pred_region
        _
      $region20: #{net_forward.3} parent=11 // pred_fallthru
        _
    $region12: #{net_forward.3} parent=5 // pred_fallthru
      _
    %p205 = scmp.lt.s32.totalorder %s12, 2
    // Predicated region
    $region21: #{net_forward.3} parent=5 // pred_check
      %p206 = pneg %p205
    $region22: #{net_forward.3} parent=5 // pred_check_branch
      %208 = sbr.rel (%p206) target = $region24
    $region23: #{net_forward.3} parent=5 // pred_region
      // Predicated region
      $region25: #{net_forward.3} parent=23 // pred_check
        %p209 = pneg %p32
      $region26: #{net_forward.3} parent=23 // pred_check_branch
        %211 = sbr.rel (%p209) target = $region28
      $region27: #{net_forward.3} parent=23 // pred_region
        %s212 = smul.u32 18, %s12
        %p213 = scmp.lt.s32.totalorder %s212, 35
        %s214 = scalar_select %p213, %s212, 35
        %s215 = smul.addr %s214, 4
        %s216 = scalar_lea.vmem %s0, %s215
        %s217 = smul.u32 18, %s12
      $region28: #{net_forward.3} parent=23 // pred_fallthru
        _
      // Predicated region
      $region29: #{net_forward.3} parent=23 // pred_check
        %p218 = pneg %p58
      $region30: #{net_forward.3} parent=23 // pred_check_branch
        %220 = sbr.rel (%p218) target = $region32
      $region31: #{net_forward.3} parent=23 // pred_region
        %s221 = smul.u32 18, %s12
        %p222 = scmp.lt.s32.totalorder %s221, 35
        %s223 = scalar_select %p222, %s221, 35
        %s224 = smul.addr %s223, 4
        %s225 = scalar_lea.vmem %s1, %s224
        %s226 = smul.u32 18, %s12
      $region32: #{net_forward.3} parent=23 // pred_fallthru
        _
      // Predicated region
      $region33: #{net_forward.3} parent=23 // pred_check
        %p227 = pneg %p84
      $region34: #{net_forward.3} parent=23 // pred_check_branch
        %229 = sbr.rel (%p227) target = $region36
      $region35: #{net_forward.3} parent=23 // pred_region
        %s230 = smul.u32 18, %s12
        %p231 = scmp.lt.s32.totalorder %s230, 35
        %s232 = scalar_select %p231, %s230, 35
        %s233 = smul.addr %s232, 4
        %s234 = scalar_lea.vmem %s2, %s233
        %s235 = smul.u32 18, %s12
      $region36: #{net_forward.3} parent=23 // pred_fallthru
        _
      // Predicated region
      $region37: #{net_forward.3} parent=23 // pred_check
        %p236 = pneg %p110
      $region38: #{net_forward.3} parent=23 // pred_check_branch
        %238 = sbr.rel (%p236) target = $region40
      $region39: #{net_forward.3} parent=23 // pred_region
        %s239 = smul.u32 18, %s12
        %p240 = scmp.lt.s32.totalorder %s239, 35
        %s241 = scalar_select %p240, %s239, 35
        %s242 = smul.addr %s241, 4
        %s243 = scalar_lea.vmem %s3, %s242
        %s244 = smul.u32 18, %s12
      $region40: #{net_forward.3} parent=23 // pred_fallthru
        _
    $region24: #{net_forward.3} parent=5 // pred_fallthru
      _
    %p245 = scmp.le.s32.totalorder 1, %s12
    %p246 = scmp.lt.s32.totalorder %s12, 3
    %p247 = pnand %p245, %p246
    %p248 = pneg %p247
    // Predicated region
    $region41: #{net_forward.3} parent=5 // pred_check
      _
    $region42: #{net_forward.3} parent=5 // pred_check_branch
      %250 = sbr.rel (%p247) target = $region44
    $region43: #{net_forward.3} parent=5 // pred_region
      %s251 = ssub.s32 %s12, 1
      %s252 = smul.u32 18, %s17
      %p253 = scmp.lt.s32.totalorder %s252, 35
      %s254 = scalar_select %p253, %s252, 35
      %s255 = smul.addr %s254, 4
      %s256 = scalar_lea.vmem %s0, %s255
      %p257 = pneg %p38
      %p258 = pneg %p35
      %s259 = smul.u32 18, %s17
      %p260 = scmp.lt.s32.totalorder %s259, 35
      %s261 = scalar_select %p260, %s259, 35
      %s262 = smul.addr %s261, 4
      %s263 = scalar_lea.vmem %s1, %s262
      %p264 = pneg %p64
      %p265 = pneg %p61
      %s266 = smul.u32 18, %s17
      %p267 = scmp.lt.s32.totalorder %s266, 35
      %s268 = scalar_select %p267, %s266, 35
      %s269 = smul.addr %s268, 4
      %s270 = scalar_lea.vmem %s2, %s269
      %p271 = pneg %p90
      %p272 = pneg %p87
      %s273 = smul.u32 18, %s17
      %p274 = scmp.lt.s32.totalorder %s273, 35
      %s275 = scalar_select %p274, %s273, 35
      %s276 = smul.addr %s275, 4
      %s277 = scalar_lea.vmem %s3, %s276
      %p278 = pneg %p116
      %p279 = pneg %p113
      %p280 = pneg %p137
      %p281 = pneg %p134
      %p282 = pneg %p158
      %p283 = pneg %p155
      %p284 = pneg %p184
      %p285 = pneg %p181
      %s286 = smul.u32 18, %s17
      %p287 = scmp.lt.s32.totalorder %s286, 35
      %s288 = scalar_select %p287, %s286, 35
      %s289 = smul.addr %s288, 8
      %s290 = scalar_lea.vmem %s6, %s289
      %s291 = smul.u32 18, %s17
      %p292 = scmp.lt.s32.totalorder %s291, 35
      %s293 = scalar_select %p292, %s291, 35
      %s294 = smul.addr %s293, 4
      %s295 = scalar_lea.vmem %s0, %s294
      %s296 = smul.u32 18, %s17
      %s297 = smul.u32 18, %s17
      %p298 = scmp.lt.s32.totalorder %s297, 35
      %s299 = scalar_select %p298, %s297, 35
      %s300 = smul.addr %s299, 4
      %s301 = scalar_lea.vmem %s1, %s300
      %s302 = smul.u32 18, %s17
      %s303 = smul.u32 18, %s17
      %p304 = scmp.lt.s32.totalorder %s303, 35
      %s305 = scalar_select %p304, %s303, 35
      %s306 = smul.addr %s305, 4
      %s307 = scalar_lea.vmem %s2, %s306
      %s308 = smul.u32 18, %s17
      %s309 = smul.u32 18, %s17
      %p310 = scmp.lt.s32.totalorder %s309, 35
      %s311 = scalar_select %p310, %s309, 35
      %s312 = smul.addr %s311, 4
      %s313 = scalar_lea.vmem %s3, %s312
      %s314 = smul.u32 18, %s17
      %s315 = smul.u32 18, %s17
      %p316 = scmp.lt.s32.totalorder %s315, 35
      %s317 = scalar_select %p316, %s315, 35
      %s318 = smul.addr %s317, 8
      %s319 = scalar_lea.vmem %s6, %s318
      %s320 = smul.u32 18, %s17
      %v322 = vld [vmem:[%s4] sm:$0xf]
      %v323 = vld [vmem:[%s4 + $0x4] sm:$0xf]
      %v324 = vld [vmem:[%s4 + $0x8] sm:$0xf]
      %v325 = vld [vmem:[%s4 + $0xc] sm:$0x1]
      %v326 = vld [vmem:[%s295] sm:$0xf]
      %v327 = vld [vmem:[%s295 + $0x4] sm:$0xf]
      %v328 = vld [vmem:[%s295 + $0x8] sm:$0xf]
      %v329 = vld [vmem:[%s295 + $0xc] sm:$0xf]
      %v330 = vld [vmem:[%s295 + $0x10] sm:$0xf]
      %v331 = vld [vmem:[%s295 + $0x14] sm:$0xf]
      %v332 = vld [vmem:[%s295 + $0x18] sm:$0xf]
      %v333 = vld [vmem:[%s295 + $0x1c] sm:$0xf]
      %v334 = vld [vmem:[%s295 + $0x20] sm:$0xf]
      %v335 = vld [vmem:[%s295 + $0x24] sm:$0xf]
      %v336 = vld [vmem:[%s295 + $0x28] sm:$0xf]
      %v337 = vld [vmem:[%s295 + $0x2c] sm:$0xf]
      %v338 = vld [vmem:[%s295 + $0x30] sm:$0xf]
      %v339 = vld [vmem:[%s295 + $0x34] sm:$0xf]
      %v340 = vld [vmem:[%s295 + $0x38] sm:$0xf]
      %v341 = vld [vmem:[%s295 + $0x3c] sm:$0xf]
      %v342 = vld [vmem:[%s295 + $0x40] sm:$0xf]
      %v343 = vld [vmem:[%s295 + $0x44] sm:$0xf]
      %v362 = vunpack.c.l.b16 %v326
      %v363 = vunpack.c.l.b16 %v327
      %v364 = vunpack.c.l.b16 %v328
      %v365 = vunpack.c.l.b16 %v329
      %v366 = vunpack.c.l.b16 %v330
      %v367 = vunpack.c.l.b16 %v331
      %v368 = vunpack.c.l.b16 %v332
      %v369 = vunpack.c.l.b16 %v333
      %v370 = vunpack.c.l.b16 %v334
      %v371 = vunpack.c.l.b16 %v335
      %v372 = vunpack.c.l.b16 %v336
      %v373 = vunpack.c.l.b16 %v337
      %v374 = vunpack.c.l.b16 %v338
      %v375 = vunpack.c.l.b16 %v339
      %v376 = vunpack.c.l.b16 %v340
      %v377 = vunpack.c.l.b16 %v341
      %v378 = vunpack.c.l.b16 %v342
      %v379 = vunpack.c.l.b16 %v343
      %v380 = vpack.c.b16 %v363, %v362
      %v381 = vpack.c.b16 %v365, %v364
      %v382 = vpack.c.b16 %v367, %v366
      %v383 = vpack.c.b16 %v369, %v368
      %v384 = vpack.c.b16 %v371, %v370
      %v385 = vpack.c.b16 %v373, %v372
      %v386 = vpack.c.b16 %v375, %v374
      %v387 = vpack.c.b16 %v377, %v376
      %v388 = vpack.c.b16 %v379, %v378
      %v393 = vunpack.c.l.b16 %v322
      %v394 = vunpack.c.l.b16 %v323
      %v395 = vunpack.c.l.b16 %v324
      %v396 = vunpack.c.l.b16 %v325
      %v397 = vpack.c.b16 %v394, %v393
      %v398 = vpack.c.b16 %v396, %v395
      %vm400 = vcmask 203776
      %v402 = vsel %vm400, %v380, 0
      %v405 = vsel %vm400, %v381, 0
      %v408 = vsel %vm400, %v382, 0
      %v411 = vsel %vm400, %v383, 0
      %v414 = vsel %vm400, %v384, 0
      %v417 = vsel %vm400, %v385, 0
      %v420 = vsel %vm400, %v386, 0
      %v423 = vsel %vm400, %v387, 0
      %v426 = vsel %vm400, %v388, 0
      %vm428 = vcmask 1043456
      %vm429 = vcmask 1044480
      %v430 = vsel %vm428, 4294967295, 65535
      %v431 = vsel %vm429, %v430, 0
      %v433 = vand.u32 %v398, %v431
      %435 = vmatpush.bf16.msra.mxu0 0
      %436 = vmatpush.bf16.msra.mxu0 0
      %437 = vmatpush.bf16.msra.mxu0 0
      %438 = vmatpush.bf16.msra.mxu0 0
      %439 = vmatpush.bf16.msra.mxu0 0
      %440 = vmatpush.bf16.msra.mxu0 0
      %441 = vmatpush.bf16.msra.mxu0 %v433
      %442 = vmatpush.bf16.msra.mxu0 %v397
      %443 = vmatmul.bf16.gmra.mxu0 %v402
      %v444 = vpop.f32.mrf.mxu0
      %v445 = vadd.f32 0.0, %v444
      %v446 = vpop.f32.mrf.mxu0
      %v447 = vadd.f32 0.0, %v446
      %448 = vmatmul.bf16.gmra.mxu0 %v405
      %v449 = vpop.f32.mrf.mxu0
      %v450 = vadd.f32 0.0, %v449
      %v451 = vpop.f32.mrf.mxu0
      %v452 = vadd.f32 0.0, %v451
      %453 = vmatmul.bf16.gmra.mxu0 %v408
      %v454 = vpop.f32.mrf.mxu0
      %v455 = vadd.f32 0.0, %v454
      %v456 = vpop.f32.mrf.mxu0
      %v457 = vadd.f32 0.0, %v456
      %458 = vmatmul.bf16.gmra.mxu0 %v411
      %v459 = vpop.f32.mrf.mxu0
      %v460 = vadd.f32 0.0, %v459
      %v461 = vpop.f32.mrf.mxu0
      %v462 = vadd.f32 0.0, %v461
      %463 = vmatmul.bf16.gmra.mxu0 %v414
      %v464 = vpop.f32.mrf.mxu0
      %v465 = vadd.f32 0.0, %v464
      %v466 = vpop.f32.mrf.mxu0
      %v467 = vadd.f32 0.0, %v466
      %468 = vmatmul.bf16.gmra.mxu0 %v417
      %v469 = vpop.f32.mrf.mxu0
      %v470 = vadd.f32 0.0, %v469
      %v471 = vpop.f32.mrf.mxu0
      %v472 = vadd.f32 0.0, %v471
      %473 = vmatmul.bf16.gmra.mxu0 %v420
      %v474 = vpop.f32.mrf.mxu0
      %v475 = vadd.f32 0.0, %v474
      %v476 = vpop.f32.mrf.mxu0
      %v477 = vadd.f32 0.0, %v476
      %478 = vmatmul.bf16.gmra.mxu0 %v423
      %v479 = vpop.f32.mrf.mxu0
      %v480 = vadd.f32 0.0, %v479
      %v481 = vpop.f32.mrf.mxu0
      %v482 = vadd.f32 0.0, %v481
      %483 = vmatmul.bf16.gmra.mxu0 %v426
      %v484 = vpop.f32.mrf.mxu0
      %v485 = vadd.f32 0.0, %v484
      %v486 = vpop.f32.mrf.mxu0
      %v487 = vadd.f32 0.0, %v486
      %488 = vdwg.mxu0
      %v489 = vld [vmem:[%s301] sm:$0xf]
      %v490 = vld [vmem:[%s301 + $0x4] sm:$0xf]
      %v491 = vld [vmem:[%s301 + $0x8] sm:$0xf]
      %v492 = vld [vmem:[%s301 + $0xc] sm:$0xf]
      %v493 = vld [vmem:[%s301 + $0x10] sm:$0xf]
      %v494 = vld [vmem:[%s301 + $0x14] sm:$0xf]
      %v495 = vld [vmem:[%s301 + $0x18] sm:$0xf]
      %v496 = vld [vmem:[%s301 + $0x1c] sm:$0xf]
      %v497 = vld [vmem:[%s301 + $0x20] sm:$0xf]
      %v498 = vld [vmem:[%s301 + $0x24] sm:$0xf]
      %v499 = vld [vmem:[%s301 + $0x28] sm:$0xf]
      %v500 = vld [vmem:[%s301 + $0x2c] sm:$0xf]
      %v501 = vld [vmem:[%s301 + $0x30] sm:$0xf]
      %v502 = vld [vmem:[%s301 + $0x34] sm:$0xf]
      %v503 = vld [vmem:[%s301 + $0x38] sm:$0xf]
      %v504 = vld [vmem:[%s301 + $0x3c] sm:$0xf]
      %v505 = vld [vmem:[%s301 + $0x40] sm:$0xf]
      %v506 = vld [vmem:[%s301 + $0x44] sm:$0xf]
      %v525 = vunpack.c.l.b16 %v489
      %v526 = vunpack.c.l.b16 %v490
      %v527 = vunpack.c.l.b16 %v491
      %v528 = vunpack.c.l.b16 %v492
      %v529 = vunpack.c.l.b16 %v493
      %v530 = vunpack.c.l.b16 %v494
      %v531 = vunpack.c.l.b16 %v495
      %v532 = vunpack.c.l.b16 %v496
      %v533 = vunpack.c.l.b16 %v497
      %v534 = vunpack.c.l.b16 %v498
      %v535 = vunpack.c.l.b16 %v499
      %v536 = vunpack.c.l.b16 %v500
      %v537 = vunpack.c.l.b16 %v501
      %v538 = vunpack.c.l.b16 %v502
      %v539 = vunpack.c.l.b16 %v503
      %v540 = vunpack.c.l.b16 %v504
      %v541 = vunpack.c.l.b16 %v505
      %v542 = vunpack.c.l.b16 %v506
      %v543 = vpack.c.b16 %v526, %v525
      %v544 = vpack.c.b16 %v528, %v527
      %v545 = vpack.c.b16 %v530, %v529
      %v546 = vpack.c.b16 %v532, %v531
      %v547 = vpack.c.b16 %v534, %v533
      %v548 = vpack.c.b16 %v536, %v535
      %v549 = vpack.c.b16 %v538, %v537
      %v550 = vpack.c.b16 %v540, %v539
      %v551 = vpack.c.b16 %v542, %v541
      %v553 = vsel %vm400, %v543, 0
      %v556 = vsel %vm400, %v544, 0
      %v559 = vsel %vm400, %v545, 0
      %v562 = vsel %vm400, %v546, 0
      %v565 = vsel %vm400, %v547, 0
      %v568 = vsel %vm400, %v548, 0
      %v571 = vsel %vm400, %v549, 0
      %v574 = vsel %vm400, %v550, 0
      %v577 = vsel %vm400, %v551, 0
      %579 = vmatpush.bf16.msra.mxu0 0
      %580 = vmatpush.bf16.msra.mxu0 0
      %581 = vmatpush.bf16.msra.mxu0 0
      %582 = vmatpush.bf16.msra.mxu0 0
      %583 = vmatpush.bf16.msra.mxu0 0
      %584 = vmatpush.bf16.msra.mxu0 0
      %585 = vmatpush.bf16.msra.mxu0 %v433
      %586 = vmatpush.bf16.msra.mxu0 %v397
      %587 = vmatmul.bf16.gmra.mxu0 %v553
      %v588 = vpop.f32.mrf.mxu0
      %v589 = vadd.f32 0.0, %v588
      %v590 = vpop.f32.mrf.mxu0
      %v591 = vadd.f32 0.0, %v590
      %592 = vmatmul.bf16.gmra.mxu0 %v556
      %v593 = vpop.f32.mrf.mxu0
      %v594 = vadd.f32 0.0, %v593
      %v595 = vpop.f32.mrf.mxu0
      %v596 = vadd.f32 0.0, %v595
      %597 = vmatmul.bf16.gmra.mxu0 %v559
      %v598 = vpop.f32.mrf.mxu0
      %v599 = vadd.f32 0.0, %v598
      %v600 = vpop.f32.mrf.mxu0
      %v601 = vadd.f32 0.0, %v600
      %602 = vmatmul.bf16.gmra.mxu0 %v562
      %v603 = vpop.f32.mrf.mxu0
      %v604 = vadd.f32 0.0, %v603
      %v605 = vpop.f32.mrf.mxu0
      %v606 = vadd.f32 0.0, %v605
      %607 = vmatmul.bf16.gmra.mxu0 %v565
      %v608 = vpop.f32.mrf.mxu0
      %v609 = vadd.f32 0.0, %v608
      %v610 = vpop.f32.mrf.mxu0
      %v611 = vadd.f32 0.0, %v610
      %612 = vmatmul.bf16.gmra.mxu0 %v568
      %v613 = vpop.f32.mrf.mxu0
      %v614 = vadd.f32 0.0, %v613
      %v615 = vpop.f32.mrf.mxu0
      %v616 = vadd.f32 0.0, %v615
      %617 = vmatmul.bf16.gmra.mxu0 %v571
      %v618 = vpop.f32.mrf.mxu0
      %v619 = vadd.f32 0.0, %v618
      %v620 = vpop.f32.mrf.mxu0
      %v621 = vadd.f32 0.0, %v620
      %622 = vmatmul.bf16.gmra.mxu0 %v574
      %v623 = vpop.f32.mrf.mxu0
      %v624 = vadd.f32 0.0, %v623
      %v625 = vpop.f32.mrf.mxu0
      %v626 = vadd.f32 0.0, %v625
      %627 = vmatmul.bf16.gmra.mxu0 %v577
      %v628 = vpop.f32.mrf.mxu0
      %v629 = vadd.f32 0.0, %v628
      %v630 = vpop.f32.mrf.mxu0
      %v631 = vadd.f32 0.0, %v630
      %632 = vdwg.mxu0
      %v633 = vmax.f32 %v445, %v589
      %v634 = vmax.f32 %v447, %v591
      %v635 = vmax.f32 %v450, %v594
      %v636 = vmax.f32 %v452, %v596
      %v637 = vmax.f32 %v455, %v599
      %v638 = vmax.f32 %v457, %v601
      %v639 = vmax.f32 %v460, %v604
      %v640 = vmax.f32 %v462, %v606
      %v641 = vmax.f32 %v465, %v609
      %v642 = vmax.f32 %v467, %v611
      %v643 = vmax.f32 %v470, %v614
      %v644 = vmax.f32 %v472, %v616
      %v645 = vmax.f32 %v475, %v619
      %v646 = vmax.f32 %v477, %v621
      %v647 = vmax.f32 %v480, %v624
      %v648 = vmax.f32 %v482, %v626
      %v649 = vmax.f32 %v485, %v629
      %v650 = vmax.f32 %v487, %v631
      %v651 = vld [vmem:[%s307] sm:$0xf]
      %v652 = vld [vmem:[%s307 + $0x4] sm:$0xf]
      %v653 = vld [vmem:[%s307 + $0x8] sm:$0xf]
      %v654 = vld [vmem:[%s307 + $0xc] sm:$0xf]
      %v655 = vld [vmem:[%s307 + $0x10] sm:$0xf]
      %v656 = vld [vmem:[%s307 + $0x14] sm:$0xf]
      %v657 = vld [vmem:[%s307 + $0x18] sm:$0xf]
      %v658 = vld [vmem:[%s307 + $0x1c] sm:$0xf]
      %v659 = vld [vmem:[%s307 + $0x20] sm:$0xf]
      %v660 = vld [vmem:[%s307 + $0x24] sm:$0xf]
      %v661 = vld [vmem:[%s307 + $0x28] sm:$0xf]
      %v662 = vld [vmem:[%s307 + $0x2c] sm:$0xf]
      %v663 = vld [vmem:[%s307 + $0x30] sm:$0xf]
      %v664 = vld [vmem:[%s307 + $0x34] sm:$0xf]
      %v665 = vld [vmem:[%s307 + $0x38] sm:$0xf]
      %v666 = vld [vmem:[%s307 + $0x3c] sm:$0xf]
      %v667 = vld [vmem:[%s307 + $0x40] sm:$0xf]
      %v668 = vld [vmem:[%s307 + $0x44] sm:$0xf]
      %v687 = vunpack.c.l.b16 %v651
      %v688 = vunpack.c.l.b16 %v652
      %v689 = vunpack.c.l.b16 %v653
      %v690 = vunpack.c.l.b16 %v654
      %v691 = vunpack.c.l.b16 %v655
      %v692 = vunpack.c.l.b16 %v656
      %v693 = vunpack.c.l.b16 %v657
      %v694 = vunpack.c.l.b16 %v658
      %v695 = vunpack.c.l.b16 %v659
      %v696 = vunpack.c.l.b16 %v660
      %v697 = vunpack.c.l.b16 %v661
      %v698 = vunpack.c.l.b16 %v662
      %v699 = vunpack.c.l.b16 %v663
      %v700 = vunpack.c.l.b16 %v664
      %v701 = vunpack.c.l.b16 %v665
      %v702 = vunpack.c.l.b16 %v666
      %v703 = vunpack.c.l.b16 %v667
      %v704 = vunpack.c.l.b16 %v668
      %v705 = vpack.c.b16 %v688, %v687
      %v706 = vpack.c.b16 %v690, %v689
      %v707 = vpack.c.b16 %v692, %v691
      %v708 = vpack.c.b16 %v694, %v693
      %v709 = vpack.c.b16 %v696, %v695
      %v710 = vpack.c.b16 %v698, %v697
      %v711 = vpack.c.b16 %v700, %v699
      %v712 = vpack.c.b16 %v702, %v701
      %v713 = vpack.c.b16 %v704, %v703
      %v715 = vsel %vm400, %v705, 0
      %v718 = vsel %vm400, %v706, 0
      %v721 = vsel %vm400, %v707, 0
      %v724 = vsel %vm400, %v708, 0
      %v727 = vsel %vm400, %v709, 0
      %v730 = vsel %vm400, %v710, 0
      %v733 = vsel %vm400, %v711, 0
      %v736 = vsel %vm400, %v712, 0
      %v739 = vsel %vm400, %v713, 0
      %741 = vmatpush.bf16.msra.mxu0 0
      %742 = vmatpush.bf16.msra.mxu0 0
      %743 = vmatpush.bf16.msra.mxu0 0
      %744 = vmatpush.bf16.msra.mxu0 0
      %745 = vmatpush.bf16.msra.mxu0 0
      %746 = vmatpush.bf16.msra.mxu0 0
      %747 = vmatpush.bf16.msra.mxu0 %v433
      %748 = vmatpush.bf16.msra.mxu0 %v397
      %749 = vmatmul.bf16.gmra.mxu0 %v715
      %v750 = vpop.f32.mrf.mxu0
      %v751 = vadd.f32 0.0, %v750
      %v752 = vpop.f32.mrf.mxu0
      %v753 = vadd.f32 0.0, %v752
      %754 = vmatmul.bf16.gmra.mxu0 %v718
      %v755 = vpop.f32.mrf.mxu0
      %v756 = vadd.f32 0.0, %v755
      %v757 = vpop.f32.mrf.mxu0
      %v758 = vadd.f32 0.0, %v757
      %759 = vmatmul.bf16.gmra.mxu0 %v721
      %v760 = vpop.f32.mrf.mxu0
      %v761 = vadd.f32 0.0, %v760
      %v762 = vpop.f32.mrf.mxu0
      %v763 = vadd.f32 0.0, %v762
      %764 = vmatmul.bf16.gmra.mxu0 %v724
      %v765 = vpop.f32.mrf.mxu0
      %v766 = vadd.f32 0.0, %v765
      %v767 = vpop.f32.mrf.mxu0
      %v768 = vadd.f32 0.0, %v767
      %769 = vmatmul.bf16.gmra.mxu0 %v727
      %v770 = vpop.f32.mrf.mxu0
      %v771 = vadd.f32 0.0, %v770
      %v772 = vpop.f32.mrf.mxu0
      %v773 = vadd.f32 0.0, %v772
      %774 = vmatmul.bf16.gmra.mxu0 %v730
      %v775 = vpop.f32.mrf.mxu0
      %v776 = vadd.f32 0.0, %v775
      %v777 = vpop.f32.mrf.mxu0
      %v778 = vadd.f32 0.0, %v777
      %779 = vmatmul.bf16.gmra.mxu0 %v733
      %v780 = vpop.f32.mrf.mxu0
      %v781 = vadd.f32 0.0, %v780
      %v782 = vpop.f32.mrf.mxu0
      %v783 = vadd.f32 0.0, %v782
      %784 = vmatmul.bf16.gmra.mxu0 %v736
      %v785 = vpop.f32.mrf.mxu0
      %v786 = vadd.f32 0.0, %v785
      %v787 = vpop.f32.mrf.mxu0
      %v788 = vadd.f32 0.0, %v787
      %789 = vmatmul.bf16.gmra.mxu0 %v739
      %v790 = vpop.f32.mrf.mxu0
      %v791 = vadd.f32 0.0, %v790
      %v792 = vpop.f32.mrf.mxu0
      %v793 = vadd.f32 0.0, %v792
      %794 = vdwg.mxu0
      %v795 = vld [vmem:[%s313] sm:$0xf]
      %v796 = vld [vmem:[%s313 + $0x4] sm:$0xf]
      %v797 = vld [vmem:[%s313 + $0x8] sm:$0xf]
      %v798 = vld [vmem:[%s313 + $0xc] sm:$0xf]
      %v799 = vld [vmem:[%s313 + $0x10] sm:$0xf]
      %v800 = vld [vmem:[%s313 + $0x14] sm:$0xf]
      %v801 = vld [vmem:[%s313 + $0x18] sm:$0xf]
      %v802 = vld [vmem:[%s313 + $0x1c] sm:$0xf]
      %v803 = vld [vmem:[%s313 + $0x20] sm:$0xf]
      %v804 = vld [vmem:[%s313 + $0x24] sm:$0xf]
      %v805 = vld [vmem:[%s313 + $0x28] sm:$0xf]
      %v806 = vld [vmem:[%s313 + $0x2c] sm:$0xf]
      %v807 = vld [vmem:[%s313 + $0x30] sm:$0xf]
      %v808 = vld [vmem:[%s313 + $0x34] sm:$0xf]
      %v809 = vld [vmem:[%s313 + $0x38] sm:$0xf]
      %v810 = vld [vmem:[%s313 + $0x3c] sm:$0xf]
      %v811 = vld [vmem:[%s313 + $0x40] sm:$0xf]
      %v812 = vld [vmem:[%s313 + $0x44] sm:$0xf]
      %v831 = vunpack.c.l.b16 %v795
      %v832 = vunpack.c.l.b16 %v796
      %v833 = vunpack.c.l.b16 %v797
      %v834 = vunpack.c.l.b16 %v798
      %v835 = vunpack.c.l.b16 %v799
      %v836 = vunpack.c.l.b16 %v800
      %v837 = vunpack.c.l.b16 %v801
      %v838 = vunpack.c.l.b16 %v802
      %v839 = vunpack.c.l.b16 %v803
      %v840 = vunpack.c.l.b16 %v804
      %v841 = vunpack.c.l.b16 %v805
      %v842 = vunpack.c.l.b16 %v806
      %v843 = vunpack.c.l.b16 %v807
      %v844 = vunpack.c.l.b16 %v808
      %v845 = vunpack.c.l.b16 %v809
      %v846 = vunpack.c.l.b16 %v810
      %v847 = vunpack.c.l.b16 %v811
      %v848 = vunpack.c.l.b16 %v812
      %v849 = vpack.c.b16 %v832, %v831
      %v850 = vpack.c.b16 %v834, %v833
      %v851 = vpack.c.b16 %v836, %v835
      %v852 = vpack.c.b16 %v838, %v837
      %v853 = vpack.c.b16 %v840, %v839
      %v854 = vpack.c.b16 %v842, %v841
      %v855 = vpack.c.b16 %v844, %v843
      %v856 = vpack.c.b16 %v846, %v845
      %v857 = vpack.c.b16 %v848, %v847
      %v859 = vsel %vm400, %v849, 0
      %v862 = vsel %vm400, %v850, 0
      %v865 = vsel %vm400, %v851, 0
      %v868 = vsel %vm400, %v852, 0
      %v871 = vsel %vm400, %v853, 0
      %v874 = vsel %vm400, %v854, 0
      %v877 = vsel %vm400, %v855, 0
      %v880 = vsel %vm400, %v856, 0
      %v883 = vsel %vm400, %v857, 0
      %885 = vmatpush.bf16.msra.mxu0 0
      %886 = vmatpush.bf16.msra.mxu0 0
      %887 = vmatpush.bf16.msra.mxu0 0
      %888 = vmatpush.bf16.msra.mxu0 0
      %889 = vmatpush.bf16.msra.mxu0 0
      %890 = vmatpush.bf16.msra.mxu0 0
      %891 = vmatpush.bf16.msra.mxu0 %v433
      %892 = vmatpush.bf16.msra.mxu0 %v397
      %893 = vmatmul.bf16.gmra.mxu0 %v859
      %v894 = vpop.f32.mrf.mxu0
      %v895 = vadd.f32 0.0, %v894
      %v896 = vpop.f32.mrf.mxu0
      %v897 = vadd.f32 0.0, %v896
      %898 = vmatmul.bf16.gmra.mxu0 %v862
      %v899 = vpop.f32.mrf.mxu0
      %v900 = vadd.f32 0.0, %v899
      %v901 = vpop.f32.mrf.mxu0
      %v902 = vadd.f32 0.0, %v901
      %903 = vmatmul.bf16.gmra.mxu0 %v865
      %v904 = vpop.f32.mrf.mxu0
      %v905 = vadd.f32 0.0, %v904
      %v906 = vpop.f32.mrf.mxu0
      %v907 = vadd.f32 0.0, %v906
      %908 = vmatmul.bf16.gmra.mxu0 %v868
      %v909 = vpop.f32.mrf.mxu0
      %v910 = vadd.f32 0.0, %v909
      %v911 = vpop.f32.mrf.mxu0
      %v912 = vadd.f32 0.0, %v911
      %913 = vmatmul.bf16.gmra.mxu0 %v871
      %v914 = vpop.f32.mrf.mxu0
      %v915 = vadd.f32 0.0, %v914
      %v916 = vpop.f32.mrf.mxu0
      %v917 = vadd.f32 0.0, %v916
      %918 = vmatmul.bf16.gmra.mxu0 %v874
      %v919 = vpop.f32.mrf.mxu0
      %v920 = vadd.f32 0.0, %v919
      %v921 = vpop.f32.mrf.mxu0
      %v922 = vadd.f32 0.0, %v921
      %923 = vmatmul.bf16.gmra.mxu0 %v877
      %v924 = vpop.f32.mrf.mxu0
      %v925 = vadd.f32 0.0, %v924
      %v926 = vpop.f32.mrf.mxu0
      %v927 = vadd.f32 0.0, %v926
      %928 = vmatmul.bf16.gmra.mxu0 %v880
      %v929 = vpop.f32.mrf.mxu0
      %v930 = vadd.f32 0.0, %v929
      %v931 = vpop.f32.mrf.mxu0
      %v932 = vadd.f32 0.0, %v931
      %933 = vmatmul.bf16.gmra.mxu0 %v883
      %v934 = vpop.f32.mrf.mxu0
      %v935 = vadd.f32 0.0, %v934
      %v936 = vpop.f32.mrf.mxu0
      %v937 = vadd.f32 0.0, %v936
      %938 = vdwg.mxu0
      %v939 = vmax.f32 %v751, %v895
      %v940 = vmax.f32 %v753, %v897
      %v941 = vmax.f32 %v756, %v900
      %v942 = vmax.f32 %v758, %v902
      %v943 = vmax.f32 %v761, %v905
      %v944 = vmax.f32 %v763, %v907
      %v945 = vmax.f32 %v766, %v910
      %v946 = vmax.f32 %v768, %v912
      %v947 = vmax.f32 %v771, %v915
      %v948 = vmax.f32 %v773, %v917
      %v949 = vmax.f32 %v776, %v920
      %v950 = vmax.f32 %v778, %v922
      %v951 = vmax.f32 %v781, %v925
      %v952 = vmax.f32 %v783, %v927
      %v953 = vmax.f32 %v786, %v930
      %v954 = vmax.f32 %v788, %v932
      %v955 = vmax.f32 %v791, %v935
      %v956 = vmax.f32 %v793, %v937
      %v957 = vmax.f32 %v633, %v939
      %v958 = vmax.f32 %v634, %v940
      %v959 = vmax.f32 %v635, %v941
      %v960 = vmax.f32 %v636, %v942
      %v961 = vmax.f32 %v637, %v943
      %v962 = vmax.f32 %v638, %v944
      %v963 = vmax.f32 %v639, %v945
      %v964 = vmax.f32 %v640, %v946
      %v965 = vmax.f32 %v641, %v947
      %v966 = vmax.f32 %v642, %v948
      %v967 = vmax.f32 %v643, %v949
      %v968 = vmax.f32 %v644, %v950
      %v969 = vmax.f32 %v645, %v951
      %v970 = vmax.f32 %v646, %v952
      %v971 = vmax.f32 %v647, %v953
      %v972 = vmax.f32 %v648, %v954
      %v973 = vmax.f32 %v649, %v955
      %v974 = vmax.f32 %v650, %v956
      %v975 = vld [vmem:[%s5] sm:$0x1]
      %v977 = vperm.slane %v975, 0
      %v979 = vadd.f32 %v957, %v977
      %v980 = vadd.f32 %v958, %v977
      %v981 = vadd.f32 %v959, %v977
      %v982 = vadd.f32 %v960, %v977
      %v983 = vadd.f32 %v961, %v977
      %v984 = vadd.f32 %v962, %v977
      %v985 = vadd.f32 %v963, %v977
      %v986 = vadd.f32 %v964, %v977
      %v987 = vadd.f32 %v965, %v977
      %v988 = vadd.f32 %v966, %v977
      %v989 = vadd.f32 %v967, %v977
      %v990 = vadd.f32 %v968, %v977
      %v991 = vadd.f32 %v969, %v977
      %v992 = vadd.f32 %v970, %v977
      %v993 = vadd.f32 %v971, %v977
      %v994 = vadd.f32 %v972, %v977
      %v995 = vadd.f32 %v973, %v977
      %v996 = vadd.f32 %v974, %v977
      %v997 = vmax.f32 %v979, 0.0
      %v998 = vmax.f32 %v980, 0.0
      %v999 = vmax.f32 %v981, 0.0
      %v1000 = vmax.f32 %v982, 0.0
      %v1001 = vmax.f32 %v983, 0.0
      %v1002 = vmax.f32 %v984, 0.0
      %v1003 = vmax.f32 %v985, 0.0
      %v1004 = vmax.f32 %v986, 0.0
      %v1005 = vmax.f32 %v987, 0.0
      %v1006 = vmax.f32 %v988, 0.0
      %v1007 = vmax.f32 %v989, 0.0
      %v1008 = vmax.f32 %v990, 0.0
      %v1009 = vmax.f32 %v991, 0.0
      %v1010 = vmax.f32 %v992, 0.0
      %v1011 = vmax.f32 %v993, 0.0
      %v1012 = vmax.f32 %v994, 0.0
      %v1013 = vmax.f32 %v995, 0.0
      %v1014 = vmax.f32 %v996, 0.0
      %vm1015 = vcmask 64512
      %1016 = vst.msk [vmem:[%s319] sm:$0xff] %vm1015, %v997
      %1017 = vst.msk [vmem:[%s319 + $0x8] sm:$0xff] %vm1015, %v998
      %1018 = vst.msk [vmem:[%s319 + $0x10] sm:$0xff] %vm1015, %v999
      %1019 = vst.msk [vmem:[%s319 + $0x18] sm:$0xff] %vm1015, %v1000
      %1020 = vst.msk [vmem:[%s319 + $0x20] sm:$0xff] %vm1015, %v1001
      %1021 = vst.msk [vmem:[%s319 + $0x28] sm:$0xff] %vm1015, %v1002
      %1022 = vst.msk [vmem:[%s319 + $0x30] sm:$0xff] %vm1015, %v1003
      %1023 = vst.msk [vmem:[%s319 + $0x38] sm:$0xff] %vm1015, %v1004
      %1024 = vst.msk [vmem:[%s319 + $0x40] sm:$0xff] %vm1015, %v1005
      %1025 = vst.msk [vmem:[%s319 + $0x48] sm:$0xff] %vm1015, %v1006
      %1026 = vst.msk [vmem:[%s319 + $0x50] sm:$0xff] %vm1015, %v1007
      %1027 = vst.msk [vmem:[%s319 + $0x58] sm:$0xff] %vm1015, %v1008
      %1028 = vst.msk [vmem:[%s319 + $0x60] sm:$0xff] %vm1015, %v1009
      %1029 = vst.msk [vmem:[%s319 + $0x68] sm:$0xff] %vm1015, %v1010
      %1030 = vst.msk [vmem:[%s319 + $0x70] sm:$0xff] %vm1015, %v1011
      %1031 = vst.msk [vmem:[%s319 + $0x78] sm:$0xff] %vm1015, %v1012
      %1032 = vst.msk [vmem:[%s319 + $0x80] sm:$0xff] %vm1015, %v1013
      %1033 = vst.msk [vmem:[%s319 + $0x88] sm:$0xff] %vm1015, %v1014
      %s1034 = smul.u32 18, %s17
      %p1035 = scmp.lt.s32.totalorder %s1034, 35
      %s1036 = scalar_select %p1035, %s1034, 35
      %s1037 = smul.addr %s1036, 8
      %s1038 = scalar_lea.vmem %s6, %s1037
      // Predicated region
      $region45: #{net_forward.3} parent=43 // pred_check
        %p1039 = pneg %p181
      $region46: #{net_forward.3} parent=43 // pred_check_branch
        %1041 = sbr.rel (%p1039) target = $region48
      $region47: #{net_forward.3} parent=43 // pred_region
        %s1042 = smul.u32 18, %s17
      $region48: #{net_forward.3} parent=43 // pred_fallthru
        _
    $region44: #{net_forward.3} parent=5 // pred_fallthru
      _
    %p1043 = scmp.le.s32.totalorder 2, %s12
    // Predicated region
    $region49: #{net_forward.3} parent=5 // pred_check
      %p1044 = pneg %p1043
    $region50: #{net_forward.3} parent=5 // pred_check_branch
      %1046 = sbr.rel (%p1044) target = $region52
    $region51: #{net_forward.3} parent=5 // pred_region
      %s1047 = ssub.s32 %s12, 2
      // Predicated region
      $region53: #{net_forward.3} parent=51 // pred_check
        %p1048 = pneg %p187
      $region54: #{net_forward.3} parent=51 // pred_check_branch
        %1050 = sbr.rel (%p1048) target = $region56
      $region55: #{net_forward.3} parent=51 // pred_region
        %s1051 = smul.u32 18, %s18
        %p1052 = scmp.lt.s32.totalorder %s1051, 35
        %s1053 = scalar_select %p1052, %s1051, 35
        %s1054 = smul.addr %s1053, 8
        %s1055 = scalar_lea.vmem %s6, %s1054
      $region56: #{net_forward.3} parent=51 // pred_fallthru
        _
    $region52: #{net_forward.3} parent=5 // pred_fallthru
      _
  $region6: #{net_forward.3} parent=0 // loop_footer
    %s16 = sadd.s32 1, %s12
  $region7: #{net_forward.3} parent=0 // loop_footer_branch
    %11 = sbr.rel target = $region3
  $region8: #{net_forward.3} parent=0 // loop_exit
    _

// kernel: net_forward.4
$region0: #{net_forward.4}
  #allocation0 [shape = 'u32[]', space=smem, size = 0x4, offset = 0x4, fixed_abs, tag = 'smem constant byte address 0x4 - core index']
  #allocation1 [shape = 'u32[72,128]{1,0:T(1,128)}', space=vmem, size = 0x9000, scoped, tag = 'internal scratch']
  %s0 = inlined_call_operand.vmem [shape: bf16[32,200], index: 0, kind: input, shape index: {}]
  %s1 = inlined_call_operand.vmem [shape: bf16[32,200], index: 1, kind: input, shape index: {}]
  %s2 = inlined_call_operand.vmem [shape: bf16[32,200], index: 2, kind: input, shape index: {}]
  %s3 = inlined_call_operand.vmem [shape: bf16[32,200], index: 3, kind: input, shape index: {}]
  %s4 = inlined_call_operand.vmem [shape: bf16[200,16], index: 4, kind: input, shape index: {}]
  %s5 = inlined_call_operand.vmem [shape: f32[1,16], index: 5, kind: input, shape index: {}]
  %s6 = inlined_call_operand.vmem [shape: f32[32,16], index: 6, kind: output, shape index: {}]
  %s7 = sld [smem:[#allocation0]]
  $region57: #{net_forward.4} parent=0
    _
  %s9 = ssub.s32 1, %s7
  %s10 = scalar_select 0, %s9, %s7
  loop: start=0, step=1, limit=4
  $region2: #{net_forward.4} parent=0 // loop_pre_header
    _
  $region3: #{net_forward.4} parent=0 // loop_header
    %s12 = sphi 0, %s16
    %p13 = scmp.ge.s32.totalorder %s12, 4
    %s22 = sphi 0, %s24
    %s25 = sphi 0, %s22
    %s26 = sphi 0, %s25
    %s42 = sphi 0, %s26
    %s48 = sphi 0, %s50
    %s51 = sphi 0, %s48
    %s52 = sphi 0, %s51
    %s68 = sphi 0, %s52
    %s74 = sphi 0, %s76
    %s77 = sphi 0, %s74
    %s78 = sphi 0, %s77
    %s94 = sphi 0, %s78
    %s100 = sphi 0, %s102
    %s103 = sphi 0, %s100
    %s104 = sphi 0, %s103
    %s120 = sphi 0, %s104
    %s124 = sphi 0, %s124
    %s126 = sphi 0, %s124
    %s127 = sphi 0, %s126
    %s141 = sphi 0, %s127
    %s145 = sphi 0, %s145
    %s147 = sphi 0, %s145
    %s148 = sphi 0, %s147
    %s162 = sphi 0, %s148
    %s168 = sphi 0, %s170
    %s171 = sphi 0, %s168
    %s172 = sphi 0, %s171
    %s188 = sphi 0, %s172
  $region4: #{net_forward.4} parent=0 // loop_header_branch
    %15 = sbr.rel (%p13) target = $region8
  $region5: #{net_forward.4} parent=0 // loop_body
    %s17 = ssub.s32 %s12, 1
    %s18 = ssub.s32 %s12, 2
    %s19 = sadd.s32 %s12, 1
    %s20 = ssub.s32 %s12, %s19
    %p21 = scmp.eq.s32.totalorder %s20, 0
    %s23 = sadd.s32 %s22, 1
    %s24 = scalar_select %p21, %s22, %s23
    %p27 = pneg %p21
    %p28 = scmp.eq.s32.totalorder %s12, 1
    %p29 = por %p27, %p28
    %p30 = scmp.ne.s32.totalorder %s22, %s25
    %p31 = scmp.eq.s32.totalorder %s12, 0
    %p32 = por %p30, %p31
    %p33 = scmp.ne.s32.totalorder %s22, %s25
    %p34 = scmp.eq.s32.totalorder %s17, 1
    %p35 = por %p33, %p34
    %p36 = scmp.ne.s32.totalorder %s25, %s26
    %p37 = scmp.eq.s32.totalorder %s17, 0
    %p38 = por %p36, %p37
    %p39 = scmp.ne.s32.totalorder %s25, %s26
    %p40 = scmp.eq.s32.totalorder %s18, 1
    %p41 = por %p39, %p40
    %p43 = scmp.ne.s32.totalorder %s26, %s42
    %p44 = scmp.eq.s32.totalorder %s18, 0
    %p45 = por %p43, %p44
    %s46 = ssub.s32 %s12, %s19
    %p47 = scmp.eq.s32.totalorder %s46, 0
    %s49 = sadd.s32 %s48, 1
    %s50 = scalar_select %p47, %s48, %s49
    %p53 = pneg %p47
    %p54 = scmp.eq.s32.totalorder %s12, 1
    %p55 = por %p53, %p54
    %p56 = scmp.ne.s32.totalorder %s48, %s51
    %p57 = scmp.eq.s32.totalorder %s12, 0
    %p58 = por %p56, %p57
    %p59 = scmp.ne.s32.totalorder %s48, %s51
    %p60 = scmp.eq.s32.totalorder %s17, 1
    %p61 = por %p59, %p60
    %p62 = scmp.ne.s32.totalorder %s51, %s52
    %p63 = scmp.eq.s32.totalorder %s17, 0
    %p64 = por %p62, %p63
    %p65 = scmp.ne.s32.totalorder %s51, %s52
    %p66 = scmp.eq.s32.totalorder %s18, 1
    %p67 = por %p65, %p66
    %p69 = scmp.ne.s32.totalorder %s52, %s68
    %p70 = scmp.eq.s32.totalorder %s18, 0
    %p71 = por %p69, %p70
    %s72 = ssub.s32 %s12, %s19
    %p73 = scmp.eq.s32.totalorder %s72, 0
    %s75 = sadd.s32 %s74, 1
    %s76 = scalar_select %p73, %s74, %s75
    %p79 = pneg %p73
    %p80 = scmp.eq.s32.totalorder %s12, 1
    %p81 = por %p79, %p80
    %p82 = scmp.ne.s32.totalorder %s74, %s77
    %p83 = scmp.eq.s32.totalorder %s12, 0
    %p84 = por %p82, %p83
    %p85 = scmp.ne.s32.totalorder %s74, %s77
    %p86 = scmp.eq.s32.totalorder %s17, 1
    %p87 = por %p85, %p86
    %p88 = scmp.ne.s32.totalorder %s77, %s78
    %p89 = scmp.eq.s32.totalorder %s17, 0
    %p90 = por %p88, %p89
    %p91 = scmp.ne.s32.totalorder %s77, %s78
    %p92 = scmp.eq.s32.totalorder %s18, 1
    %p93 = por %p91, %p92
    %p95 = scmp.ne.s32.totalorder %s78, %s94
    %p96 = scmp.eq.s32.totalorder %s18, 0
    %p97 = por %p95, %p96
    %s98 = ssub.s32 %s12, %s19
    %p99 = scmp.eq.s32.totalorder %s98, 0
    %s101 = sadd.s32 %s100, 1
    %s102 = scalar_select %p99, %s100, %s101
    %p105 = pneg %p99
    %p106 = scmp.eq.s32.totalorder %s12, 1
    %p107 = por %p105, %p106
    %p108 = scmp.ne.s32.totalorder %s100, %s103
    %p109 = scmp.eq.s32.totalorder %s12, 0
    %p110 = por %p108, %p109
    %p111 = scmp.ne.s32.totalorder %s100, %s103
    %p112 = scmp.eq.s32.totalorder %s17, 1
    %p113 = por %p111, %p112
    %p114 = scmp.ne.s32.totalorder %s103, %s104
    %p115 = scmp.eq.s32.totalorder %s17, 0
    %p116 = por %p114, %p115
    %p117 = scmp.ne.s32.totalorder %s103, %s104
    %p118 = scmp.eq.s32.totalorder %s18, 1
    %p119 = por %p117, %p118
    %p121 = scmp.ne.s32.totalorder %s104, %s120
    %p122 = scmp.eq.s32.totalorder %s18, 0
    %p123 = por %p121, %p122
    %s125 = sadd.s32 %s124, 1
    %p128 = scmp.eq.s32.totalorder %s12, 1
    %p129 = scmp.ne.s32.totalorder %s124, %s126
    %p130 = scmp.eq.s32.totalorder %s12, 0
    %p131 = por %p129, %p130
    %p132 = scmp.ne.s32.totalorder %s124, %s126
    %p133 = scmp.eq.s32.totalorder %s17, 1
    %p134 = por %p132, %p133
    %p135 = scmp.ne.s32.totalorder %s126, %s127
    %p136 = scmp.eq.s32.totalorder %s17, 0
    %p137 = por %p135, %p136
    %p138 = scmp.ne.s32.totalorder %s126, %s127
    %p139 = scmp.eq.s32.totalorder %s18, 1
    %p140 = por %p138, %p139
    %p142 = scmp.ne.s32.totalorder %s127, %s141
    %p143 = scmp.eq.s32.totalorder %s18, 0
    %p144 = por %p142, %p143
    %s146 = sadd.s32 %s145, 1
    %p149 = scmp.eq.s32.totalorder %s12, 1
    %p150 = scmp.ne.s32.totalorder %s145, %s147
    %p151 = scmp.eq.s32.totalorder %s12, 0
    %p152 = por %p150, %p151
    %p153 = scmp.ne.s32.totalorder %s145, %s147
    %p154 = scmp.eq.s32.totalorder %s17, 1
    %p155 = por %p153, %p154
    %p156 = scmp.ne.s32.totalorder %s147, %s148
    %p157 = scmp.eq.s32.totalorder %s17, 0
    %p158 = por %p156, %p157
    %p159 = scmp.ne.s32.totalorder %s147, %s148
    %p160 = scmp.eq.s32.totalorder %s18, 1
    %p161 = por %p159, %p160
    %p163 = scmp.ne.s32.totalorder %s148, %s162
    %p164 = scmp.eq.s32.totalorder %s18, 0
    %p165 = por %p163, %p164
    %s166 = ssub.s32 %s12, %s19
    %p167 = scmp.eq.s32.totalorder %s166, 0
    %s169 = sadd.s32 %s168, 1
    %s170 = scalar_select %p167, %s168, %s169
    %p173 = pneg %p167
    %p174 = scmp.eq.s32.totalorder %s12, 1
    %p175 = por %p173, %p174
    %p176 = scmp.ne.s32.totalorder %s168, %s171
    %p177 = scmp.eq.s32.totalorder %s12, 0
    %p178 = por %p176, %p177
    %p179 = scmp.ne.s32.totalorder %s168, %s171
    %p180 = scmp.eq.s32.totalorder %s17, 1
    %p181 = por %p179, %p180
    %p182 = scmp.ne.s32.totalorder %s171, %s172
    %p183 = scmp.eq.s32.totalorder %s17, 0
    %p184 = por %p182, %p183
    %p185 = scmp.ne.s32.totalorder %s171, %s172
    %p186 = scmp.eq.s32.totalorder %s18, 1
    %p187 = por %p185, %p186
    %p189 = scmp.ne.s32.totalorder %s172, %s188
    %p190 = scmp.eq.s32.totalorder %s18, 0
    %p191 = por %p189, %p190
    %p192 = scmp.le.s32.totalorder 1, %s12
    %p193 = scmp.lt.s32.totalorder %s12, 3
    %p194 = pnand %p192, %p193
    %p195 = pneg %p194
    // Predicated region
    $region9: #{net_forward.4} parent=5 // pred_check
      _
    $region10: #{net_forward.4} parent=5 // pred_check_branch
      %197 = sbr.rel (%p194) target = $region12
    $region11: #{net_forward.4} parent=5 // pred_region
      %s198 = ssub.s32 %s12, 1
      // Predicated region
      $region13: #{net_forward.4} parent=11 // pred_check
        %p199 = pneg %p137
      $region14: #{net_forward.4} parent=11 // pred_check_branch
        %201 = sbr.rel (%p199) target = $region16
      $region15: #{net_forward.4} parent=11 // pred_region
        _
      $region16: #{net_forward.4} parent=11 // pred_fallthru
        _
      // Predicated region
      $region17: #{net_forward.4} parent=11 // pred_check
        %p202 = pneg %p158
      $region18: #{net_forward.4} parent=11 // pred_check_branch
        %204 = sbr.rel (%p202) target = $region20
      $region19: #{net_forward.4} parent=11 // pred_region
        _
      $region20: #{net_forward.4} parent=11 // pred_fallthru
        _
    $region12: #{net_forward.4} parent=5 // pred_fallthru
      _
    %p205 = scmp.lt.s32.totalorder %s12, 2
    // Predicated region
    $region21: #{net_forward.4} parent=5 // pred_check
      %p206 = pneg %p205
    $region22: #{net_forward.4} parent=5 // pred_check_branch
      %208 = sbr.rel (%p206) target = $region24
    $region23: #{net_forward.4} parent=5 // pred_region
      // Predicated region
      $region25: #{net_forward.4} parent=23 // pred_check
        %p209 = pneg %p32
      $region26: #{net_forward.4} parent=23 // pred_check_branch
        %211 = sbr.rel (%p209) target = $region28
      $region27: #{net_forward.4} parent=23 // pred_region
        %s212 = smul.u32 2, %s12
        %p213 = scmp.lt.s32.totalorder %s212, 3
        %s214 = scalar_select %p213, %s212, 3
        %s215 = smul.addr %s214, 2
        %s216 = smul.addr %s215, 4
        %s217 = scalar_lea.vmem %s0, %s216
        %s218 = smul.u32 2, %s12
      $region28: #{net_forward.4} parent=23 // pred_fallthru
        _
      // Predicated region
      $region29: #{net_forward.4} parent=23 // pred_check
        %p219 = pneg %p58
      $region30: #{net_forward.4} parent=23 // pred_check_branch
        %221 = sbr.rel (%p219) target = $region32
      $region31: #{net_forward.4} parent=23 // pred_region
        %s222 = smul.u32 2, %s12
        %p223 = scmp.lt.s32.totalorder %s222, 3
        %s224 = scalar_select %p223, %s222, 3
        %s225 = smul.addr %s224, 2
        %s226 = smul.addr %s225, 4
        %s227 = scalar_lea.vmem %s1, %s226
        %s228 = smul.u32 2, %s12
      $region32: #{net_forward.4} parent=23 // pred_fallthru
        _
      // Predicated region
      $region33: #{net_forward.4} parent=23 // pred_check
        %p229 = pneg %p84
      $region34: #{net_forward.4} parent=23 // pred_check_branch
        %231 = sbr.rel (%p229) target = $region36
      $region35: #{net_forward.4} parent=23 // pred_region
        %s232 = smul.u32 2, %s12
        %p233 = scmp.lt.s32.totalorder %s232, 3
        %s234 = scalar_select %p233, %s232, 3
        %s235 = smul.addr %s234, 2
        %s236 = smul.addr %s235, 4
        %s237 = scalar_lea.vmem %s2, %s236
        %s238 = smul.u32 2, %s12
      $region36: #{net_forward.4} parent=23 // pred_fallthru
        _
      // Predicated region
      $region37: #{net_forward.4} parent=23 // pred_check
        %p239 = pneg %p110
      $region38: #{net_forward.4} parent=23 // pred_check_branch
        %241 = sbr.rel (%p239) target = $region40
      $region39: #{net_forward.4} parent=23 // pred_region
        %s242 = smul.u32 2, %s12
        %p243 = scmp.lt.s32.totalorder %s242, 3
        %s244 = scalar_select %p243, %s242, 3
        %s245 = smul.addr %s244, 2
        %s246 = smul.addr %s245, 4
        %s247 = scalar_lea.vmem %s3, %s246
        %s248 = smul.u32 2, %s12
      $region40: #{net_forward.4} parent=23 // pred_fallthru
        _
    $region24: #{net_forward.4} parent=5 // pred_fallthru
      _
    %p249 = scmp.le.s32.totalorder 1, %s12
    %p250 = scmp.lt.s32.totalorder %s12, 3
    %p251 = pnand %p249, %p250
    %p252 = pneg %p251
    // Predicated region
    $region41: #{net_forward.4} parent=5 // pred_check
      _
    $region42: #{net_forward.4} parent=5 // pred_check_branch
      %254 = sbr.rel (%p251) target = $region44
    $region43: #{net_forward.4} parent=5 // pred_region
      %s255 = ssub.s32 %s12, 1
      %s256 = smul.u32 2, %s17
      %p257 = scmp.lt.s32.totalorder %s256, 3
      %s258 = scalar_select %p257, %s256, 3
      %s259 = smul.addr %s258, 2
      %s260 = smul.addr %s259, 4
      %s261 = scalar_lea.vmem %s0, %s260
      %p262 = pneg %p38
      %p263 = pneg %p35
      %s264 = smul.u32 2, %s17
      %p265 = scmp.lt.s32.totalorder %s264, 3
      %s266 = scalar_select %p265, %s264, 3
      %s267 = smul.addr %s266, 2
      %s268 = smul.addr %s267, 4
      %s269 = scalar_lea.vmem %s1, %s268
      %p270 = pneg %p64
      %p271 = pneg %p61
      %s272 = smul.u32 2, %s17
      %p273 = scmp.lt.s32.totalorder %s272, 3
      %s274 = scalar_select %p273, %s272, 3
      %s275 = smul.addr %s274, 2
      %s276 = smul.addr %s275, 4
      %s277 = scalar_lea.vmem %s2, %s276
      %p278 = pneg %p90
      %p279 = pneg %p87
      %s280 = smul.u32 2, %s17
      %p281 = scmp.lt.s32.totalorder %s280, 3
      %s282 = scalar_select %p281, %s280, 3
      %s283 = smul.addr %s282, 2
      %s284 = smul.addr %s283, 4
      %s285 = scalar_lea.vmem %s3, %s284
      %p286 = pneg %p116
      %p287 = pneg %p113
      %p288 = pneg %p137
      %p289 = pneg %p134
      %p290 = pneg %p158
      %p291 = pneg %p155
      %p292 = pneg %p184
      %p293 = pneg %p181
      %s294 = smul.u32 2, %s17
      %p295 = scmp.lt.s32.totalorder %s294, 3
      %s296 = scalar_select %p295, %s294, 3
      %s297 = smul.addr %s296, 8
      %s298 = scalar_lea.vmem %s6, %s297
      %s299 = smul.u32 2, %s17
      %p300 = scmp.lt.s32.totalorder %s299, 3
      %s301 = scalar_select %p300, %s299, 3
      %s302 = smul.addr %s301, 2
      %s303 = smul.addr %s302, 4
      %s304 = scalar_lea.vmem %s0, %s303
      %s305 = smul.u32 2, %s17
      %s306 = smul.u32 2, %s17
      %p307 = scmp.lt.s32.totalorder %s306, 3
      %s308 = scalar_select %p307, %s306, 3
      %s309 = smul.addr %s308, 2
      %s310 = smul.addr %s309, 4
      %s311 = scalar_lea.vmem %s1, %s310
      %s312 = smul.u32 2, %s17
      %s313 = smul.u32 2, %s17
      %p314 = scmp.lt.s32.totalorder %s313, 3
      %s315 = scalar_select %p314, %s313, 3
      %s316 = smul.addr %s315, 2
      %s317 = smul.addr %s316, 4
      %s318 = scalar_lea.vmem %s2, %s317
      %s319 = smul.u32 2, %s17
      %s320 = smul.u32 2, %s17
      %p321 = scmp.lt.s32.totalorder %s320, 3
      %s322 = scalar_select %p321, %s320, 3
      %s323 = smul.addr %s322, 2
      %s324 = smul.addr %s323, 4
      %s325 = scalar_lea.vmem %s3, %s324
      %s326 = smul.u32 2, %s17
      %s327 = smul.u32 2, %s17
      %p328 = scmp.lt.s32.totalorder %s327, 3
      %s329 = scalar_select %p328, %s327, 3
      %s330 = smul.addr %s329, 8
      %s331 = scalar_lea.vmem %s6, %s330
      %s332 = smul.u32 2, %s17
      %v334 = vld [vmem:[%s4] sm:$0xf]
      %v335 = vld [vmem:[%s4 + $0x4] sm:$0xf]
      %v336 = vld [vmem:[%s4 + $0x8] sm:$0xf]
      %v337 = vld [vmem:[%s4 + $0xc] sm:$0xf]
      %v338 = vld [vmem:[%s4 + $0x10] sm:$0xf]
      %v339 = vld [vmem:[%s4 + $0x14] sm:$0xf]
      %v340 = vld [vmem:[%s4 + $0x18] sm:$0xf]
      %v341 = vld [vmem:[%s4 + $0x1c] sm:$0xf]
      %v342 = vld [vmem:[%s4 + $0x20] sm:$0xf]
      %v343 = vld [vmem:[%s4 + $0x24] sm:$0xf]
      %v344 = vld [vmem:[%s4 + $0x28] sm:$0xf]
      %v345 = vld [vmem:[%s4 + $0x2c] sm:$0xf]
      %v346 = vld [vmem:[%s4 + $0x30] sm:$0xf]
      %v347 = vld [vmem:[%s4 + $0x34] sm:$0xf]
      %v348 = vld [vmem:[%s4 + $0x38] sm:$0xf]
      %v349 = vld [vmem:[%s4 + $0x3c] sm:$0xf]
      %v350 = vld [vmem:[%s4 + $0x40] sm:$0xf]
      %v351 = vld [vmem:[%s4 + $0x44] sm:$0xf]
      %v352 = vld [vmem:[%s4 + $0x48] sm:$0xf]
      %v353 = vld [vmem:[%s4 + $0x4c] sm:$0xf]
      %v354 = vld [vmem:[%s4 + $0x50] sm:$0xf]
      %v355 = vld [vmem:[%s4 + $0x54] sm:$0xf]
      %v356 = vld [vmem:[%s4 + $0x58] sm:$0xf]
      %v357 = vld [vmem:[%s4 + $0x5c] sm:$0xf]
      %v358 = vld [vmem:[%s4 + $0x60] sm:$0xf]
      %v359 = vld [vmem:[%s304] sm:$0xff]
      %v360 = vld [vmem:[%s304 + $0x8] sm:$0xff]
      %v363 = vunpack.c.l.b16 %v359
      %v364 = vunpack.c.h.b16 %v359
      %v365 = vunpack.c.l.b16 %v360
      %v366 = vunpack.c.h.b16 %v360
      %v367 = vpack.c.b16 %v365, %v363
      %v368 = vpack.c.b16 %v366, %v364
      %v395 = vunpack.c.l.b16 %v334
      %v396 = vunpack.c.l.b16 %v335
      %v397 = vunpack.c.l.b16 %v336
      %v398 = vunpack.c.l.b16 %v337
      %v399 = vunpack.c.l.b16 %v338
      %v400 = vunpack.c.l.b16 %v339
      %v401 = vunpack.c.l.b16 %v340
      %v402 = vunpack.c.l.b16 %v341
      %v403 = vunpack.c.l.b16 %v342
      %v404 = vunpack.c.l.b16 %v343
      %v405 = vunpack.c.l.b16 %v344
      %v406 = vunpack.c.l.b16 %v345
      %v407 = vunpack.c.l.b16 %v346
      %v408 = vunpack.c.l.b16 %v347
      %v409 = vunpack.c.l.b16 %v348
      %v410 = vunpack.c.l.b16 %v349
      %v411 = vunpack.c.l.b16 %v350
      %v412 = vunpack.c.l.b16 %v351
      %v413 = vunpack.c.l.b16 %v352
      %v414 = vunpack.c.l.b16 %v353
      %v415 = vunpack.c.l.b16 %v354
      %v416 = vunpack.c.l.b16 %v355
      %v417 = vunpack.c.l.b16 %v356
      %v418 = vunpack.c.l.b16 %v357
      %v419 = vunpack.c.l.b16 %v358
      %v420 = vpack.c.b16 %v396, %v395
      %v421 = vpack.c.b16 %v398, %v397
      %v422 = vpack.c.b16 %v400, %v399
      %v423 = vpack.c.b16 %v402, %v401
      %v424 = vpack.c.b16 %v404, %v403
      %v425 = vpack.c.b16 %v406, %v405
      %v426 = vpack.c.b16 %v408, %v407
      %v427 = vpack.c.b16 %v410, %v409
      %v428 = vpack.c.b16 %v412, %v411
      %v429 = vpack.c.b16 %v414, %v413
      %v430 = vpack.c.b16 %v416, %v415
      %v431 = vpack.c.b16 %v418, %v417
      %v432 = vpack.c.b16 %v419, %v419
      %vm445 = vcmask 588800
      %v447 = vsel %vm445, %v368, 0
      %vm449 = vcmask 1043456
      %v451 = vsel %vm449, %v432, 0
      %453 = vmatpush.bf16.msra.mxu0 %v427
      %454 = vmatpush.bf16.msra.mxu0 %v426
      %455 = vmatpush.bf16.msra.mxu0 %v425
      %456 = vmatpush.bf16.msra.mxu0 %v424
      %457 = vmatpush.bf16.msra.mxu0 %v423
      %458 = vmatpush.bf16.msra.mxu0 %v422
      %459 = vmatpush.bf16.msra.mxu0 %v421
      %460 = vmatpush.bf16.msra.mxu0 %v420
      %461 = vmatmul.bf16.gmra.mxu0 %v367
      %v462 = vpop.f32.mrf.mxu0
      %v463 = vadd.f32 0.0, %v462
      %v464 = vpop.f32.mrf.mxu0
      %v465 = vadd.f32 0.0, %v464
      %466 = vdwg.mxu0
      %467 = vmatpush.bf16.msra.mxu0 0
      %468 = vmatpush.bf16.msra.mxu0 0
      %469 = vmatpush.bf16.msra.mxu0 0
      %470 = vmatpush.bf16.msra.mxu0 %v451
      %471 = vmatpush.bf16.msra.mxu0 %v431
      %472 = vmatpush.bf16.msra.mxu0 %v430
      %473 = vmatpush.bf16.msra.mxu0 %v429
      %474 = vmatpush.bf16.msra.mxu0 %v428
      %475 = vmatmul.bf16.gmra.mxu0 %v447
      %v476 = vpop.f32.mrf.mxu0
      %v477 = vadd.f32 %v463, %v476
      %v478 = vpop.f32.mrf.mxu0
      %v479 = vadd.f32 %v465, %v478
      %480 = vdwg.mxu0
      %v481 = vld [vmem:[%s311] sm:$0xff]
      %v482 = vld [vmem:[%s311 + $0x8] sm:$0xff]
      %v485 = vunpack.c.l.b16 %v481
      %v486 = vunpack.c.h.b16 %v481
      %v487 = vunpack.c.l.b16 %v482
      %v488 = vunpack.c.h.b16 %v482
      %v489 = vpack.c.b16 %v487, %v485
      %v490 = vpack.c.b16 %v488, %v486
      %v493 = vsel %vm445, %v490, 0
      %495 = vmatpush.bf16.msra.mxu0 %v427
      %496 = vmatpush.bf16.msra.mxu0 %v426
      %497 = vmatpush.bf16.msra.mxu0 %v425
      %498 = vmatpush.bf16.msra.mxu0 %v424
      %499 = vmatpush.bf16.msra.mxu0 %v423
      %500 = vmatpush.bf16.msra.mxu0 %v422
      %501 = vmatpush.bf16.msra.mxu0 %v421
      %502 = vmatpush.bf16.msra.mxu0 %v420
      %503 = vmatmul.bf16.gmra.mxu0 %v489
      %v504 = vpop.f32.mrf.mxu0
      %v505 = vadd.f32 0.0, %v504
      %v506 = vpop.f32.mrf.mxu0
      %v507 = vadd.f32 0.0, %v506
      %508 = vdwg.mxu0
      %509 = vmatpush.bf16.msra.mxu0 0
      %510 = vmatpush.bf16.msra.mxu0 0
      %511 = vmatpush.bf16.msra.mxu0 0
      %512 = vmatpush.bf16.msra.mxu0 %v451
      %513 = vmatpush.bf16.msra.mxu0 %v431
      %514 = vmatpush.bf16.msra.mxu0 %v430
      %515 = vmatpush.bf16.msra.mxu0 %v429
      %516 = vmatpush.bf16.msra.mxu0 %v428
      %517 = vmatmul.bf16.gmra.mxu0 %v493
      %v518 = vpop.f32.mrf.mxu0
      %v519 = vadd.f32 %v505, %v518
      %v520 = vpop.f32.mrf.mxu0
      %v521 = vadd.f32 %v507, %v520
      %522 = vdwg.mxu0
      %v523 = vmax.f32 %v477, %v519
      %v524 = vmax.f32 %v479, %v521
      %v525 = vld [vmem:[%s318] sm:$0xff]
      %v526 = vld [vmem:[%s318 + $0x8] sm:$0xff]
      %v529 = vunpack.c.l.b16 %v525
      %v530 = vunpack.c.h.b16 %v525
      %v531 = vunpack.c.l.b16 %v526
      %v532 = vunpack.c.h.b16 %v526
      %v533 = vpack.c.b16 %v531, %v529
      %v534 = vpack.c.b16 %v532, %v530
      %v537 = vsel %vm445, %v534, 0
      %539 = vmatpush.bf16.msra.mxu0 %v427
      %540 = vmatpush.bf16.msra.mxu0 %v426
      %541 = vmatpush.bf16.msra.mxu0 %v425
      %542 = vmatpush.bf16.msra.mxu0 %v424
      %543 = vmatpush.bf16.msra.mxu0 %v423
      %544 = vmatpush.bf16.msra.mxu0 %v422
      %545 = vmatpush.bf16.msra.mxu0 %v421
      %546 = vmatpush.bf16.msra.mxu0 %v420
      %547 = vmatmul.bf16.gmra.mxu0 %v533
      %v548 = vpop.f32.mrf.mxu0
      %v549 = vadd.f32 0.0, %v548
      %v550 = vpop.f32.mrf.mxu0
      %v551 = vadd.f32 0.0, %v550
      %552 = vdwg.mxu0
      %553 = vmatpush.bf16.msra.mxu0 0
      %554 = vmatpush.bf16.msra.mxu0 0
      %555 = vmatpush.bf16.msra.mxu0 0
      %556 = vmatpush.bf16.msra.mxu0 %v451
      %557 = vmatpush.bf16.msra.mxu0 %v431
      %558 = vmatpush.bf16.msra.mxu0 %v430
      %559 = vmatpush.bf16.msra.mxu0 %v429
      %560 = vmatpush.bf16.msra.mxu0 %v428
      %561 = vmatmul.bf16.gmra.mxu0 %v537
      %v562 = vpop.f32.mrf.mxu0
      %v563 = vadd.f32 %v549, %v562
      %v564 = vpop.f32.mrf.mxu0
      %v565 = vadd.f32 %v551, %v564
      %566 = vdwg.mxu0
      %v567 = vld [vmem:[%s325] sm:$0xff]
      %v568 = vld [vmem:[%s325 + $0x8] sm:$0xff]
      %v571 = vunpack.c.l.b16 %v567
      %v572 = vunpack.c.h.b16 %v567
      %v573 = vunpack.c.l.b16 %v568
      %v574 = vunpack.c.h.b16 %v568
      %v575 = vpack.c.b16 %v573, %v571
      %v576 = vpack.c.b16 %v574, %v572
      %v579 = vsel %vm445, %v576, 0
      %581 = vmatpush.bf16.msra.mxu0 %v427
      %582 = vmatpush.bf16.msra.mxu0 %v426
      %583 = vmatpush.bf16.msra.mxu0 %v425
      %584 = vmatpush.bf16.msra.mxu0 %v424
      %585 = vmatpush.bf16.msra.mxu0 %v423
      %586 = vmatpush.bf16.msra.mxu0 %v422
      %587 = vmatpush.bf16.msra.mxu0 %v421
      %588 = vmatpush.bf16.msra.mxu0 %v420
      %589 = vmatmul.bf16.gmra.mxu0 %v575
      %v590 = vpop.f32.mrf.mxu0
      %v591 = vadd.f32 0.0, %v590
      %v592 = vpop.f32.mrf.mxu0
      %v593 = vadd.f32 0.0, %v592
      %594 = vdwg.mxu0
      %595 = vmatpush.bf16.msra.mxu0 0
      %596 = vmatpush.bf16.msra.mxu0 0
      %597 = vmatpush.bf16.msra.mxu0 0
      %598 = vmatpush.bf16.msra.mxu0 %v451
      %599 = vmatpush.bf16.msra.mxu0 %v431
      %600 = vmatpush.bf16.msra.mxu0 %v430
      %601 = vmatpush.bf16.msra.mxu0 %v429
      %602 = vmatpush.bf16.msra.mxu0 %v428
      %603 = vmatmul.bf16.gmra.mxu0 %v579
      %v604 = vpop.f32.mrf.mxu0
      %v605 = vadd.f32 %v591, %v604
      %v606 = vpop.f32.mrf.mxu0
      %v607 = vadd.f32 %v593, %v606
      %608 = vdwg.mxu0
      %v609 = vmax.f32 %v563, %v605
      %v610 = vmax.f32 %v565, %v607
      %v611 = vmax.f32 %v523, %v609
      %v612 = vmax.f32 %v524, %v610
      %v613 = vld [vmem:[%s5] sm:$0x1]
      %v615 = vperm.slane %v613, 0
      %v617 = vadd.f32 %v611, %v615
      %v618 = vadd.f32 %v612, %v615
      %v619 = vmax.f32 %v617, 0.0
      %v620 = vmax.f32 %v618, 0.0
      %vm621 = vcmask 130048
      %622 = vst.msk [vmem:[%s331] sm:$0xff] %vm621, %v619
      %623 = vst.msk [vmem:[%s331 + $0x8] sm:$0xff] %vm621, %v620
      %s624 = smul.u32 2, %s17
      %p625 = scmp.lt.s32.totalorder %s624, 3
      %s626 = scalar_select %p625, %s624, 3
      %s627 = smul.addr %s626, 8
      %s628 = scalar_lea.vmem %s6, %s627
      // Predicated region
      $region45: #{net_forward.4} parent=43 // pred_check
        %p629 = pneg %p181
      $region46: #{net_forward.4} parent=43 // pred_check_branch
        %631 = sbr.rel (%p629) target = $region48
      $region47: #{net_forward.4} parent=43 // pred_region
        %s632 = smul.u32 2, %s17
      $region48: #{net_forward.4} parent=43 // pred_fallthru
        _
    $region44: #{net_forward.4} parent=5 // pred_fallthru
      _
    %p633 = scmp.le.s32.totalorder 2, %s12
    // Predicated region
    $region49: #{net_forward.4} parent=5 // pred_check
      %p634 = pneg %p633
    $region50: #{net_forward.4} parent=5 // pred_check_branch
      %636 = sbr.rel (%p634) target = $region52
    $region51: #{net_forward.4} parent=5 // pred_region
      %s637 = ssub.s32 %s12, 2
      // Predicated region
      $region53: #{net_forward.4} parent=51 // pred_check
        %p638 = pneg %p187
      $region54: #{net_forward.4} parent=51 // pred_check_branch
        %640 = sbr.rel (%p638) target = $region56
      $region55: #{net_forward.4} parent=51 // pred_region
        %s641 = smul.u32 2, %s18
        %p642 = scmp.lt.s32.totalorder %s641, 3
        %s643 = scalar_select %p642, %s641, 3
        %s644 = smul.addr %s643, 8
        %s645 = scalar_lea.vmem %s6, %s644
      $region56: #{net_forward.4} parent=51 // pred_fallthru
        _
    $region52: #{net_forward.4} parent=5 // pred_fallthru
      _
  $region6: #{net_forward.4} parent=0 // loop_footer
    %s16 = sadd.s32 1, %s12
  $region7: #{net_forward.4} parent=0 // loop_footer_branch
    %11 = sbr.rel target = $region3
  $region8: #{net_forward.4} parent=0 // loop_exit
    _

// kernel: net_forward.5
$region0: #{net_forward.5}
  #allocation0 [shape = 'u32[]', space=smem, size = 0x4, offset = 0x4, fixed_abs, tag = 'smem constant byte address 0x4 - core index']
  #allocation1 [shape = 'u32[72,128]{1,0:T(1,128)}', space=vmem, size = 0x9000, scoped, tag = 'internal scratch']
  %s0 = inlined_call_operand.vmem [shape: bf16[32,256], index: 0, kind: input, shape index: {}]
  %s1 = inlined_call_operand.vmem [shape: bf16[256,128], index: 1, kind: input, shape index: {}]
  %s2 = inlined_call_operand.vmem [shape: f32[1,128], index: 2, kind: input, shape index: {}]
  %s3 = inlined_call_operand.vmem [shape: bf16[128,128], index: 3, kind: input, shape index: {}]
  %s4 = inlined_call_operand.vmem [shape: f32[1,128], index: 4, kind: input, shape index: {}]
  %s5 = inlined_call_operand.vmem [shape: bf16[128,16], index: 5, kind: input, shape index: {}]
  %s6 = inlined_call_operand.vmem [shape: f32[1,16], index: 6, kind: input, shape index: {}]
  %s7 = inlined_call_operand.vmem [shape: f32[32,16], index: 7, kind: output, shape index: {}]
  %s8 = sld [smem:[#allocation0]]
  $region61: #{net_forward.5} parent=0
    _
  %s10 = ssub.s32 1, %s8
  %s11 = scalar_select 0, %s10, %s8
  loop: start=0, step=1, limit=4
  $region2: #{net_forward.5} parent=0 // loop_pre_header
    _
  $region3: #{net_forward.5} parent=0 // loop_header
    %s13 = sphi 0, %s17
    %p14 = scmp.ge.s32.totalorder %s13, 4
    %s23 = sphi 0, %s25
    %s26 = sphi 0, %s23
    %s27 = sphi 0, %s26
    %s43 = sphi 0, %s27
    %s47 = sphi 0, %s47
    %s49 = sphi 0, %s47
    %s50 = sphi 0, %s49
    %s64 = sphi 0, %s50
    %s68 = sphi 0, %s68
    %s70 = sphi 0, %s68
    %s71 = sphi 0, %s70
    %s85 = sphi 0, %s71
    %s89 = sphi 0, %s89
    %s91 = sphi 0, %s89
    %s92 = sphi 0, %s91
    %s106 = sphi 0, %s92
    %s110 = sphi 0, %s110
    %s112 = sphi 0, %s110
    %s113 = sphi 0, %s112
    %s127 = sphi 0, %s113
    %s131 = sphi 0, %s131
    %s133 = sphi 0, %s131
    %s134 = sphi 0, %s133
    %s148 = sphi 0, %s134
    %s152 = sphi 0, %s152
    %s154 = sphi 0, %s152
    %s155 = sphi 0, %s154
    %s169 = sphi 0, %s155
    %s175 = sphi 0, %s177
    %s178 = sphi 0, %s175
    %s179 = sphi 0, %s178
    %s195 = sphi 0, %s179
  $region4: #{net_forward.5} parent=0 // loop_header_branch
    %16 = sbr.rel (%p14) target = $region8
  $region5: #{net_forward.5} parent=0 // loop_body
    %s18 = ssub.s32 %s13, 1
    %s19 = ssub.s32 %s13, 2
    %s20 = sadd.s32 %s13, 1
    %s21 = ssub.s32 %s13, %s20
    %p22 = scmp.eq.s32.totalorder %s21, 0
    %s24 = sadd.s32 %s23, 1
    %s25 = scalar_select %p22, %s23, %s24
    %p28 = pneg %p22
    %p29 = scmp.eq.s32.totalorder %s13, 1
    %p30 = por %p28, %p29
    %p31 = scmp.ne.s32.totalorder %s23, %s26
    %p32 = scmp.eq.s32.totalorder %s13, 0
    %p33 = por %p31, %p32
    %p34 = scmp.ne.s32.totalorder %s23, %s26
    %p35 = scmp.eq.s32.totalorder %s18, 1
    %p36 = por %p34, %p35
    %p37 = scmp.ne.s32.totalorder %s26, %s27
    %p38 = scmp.eq.s32.totalorder %s18, 0
    %p39 = por %p37, %p38
    %p40 = scmp.ne.s32.totalorder %s26, %s27
    %p41 = scmp.eq.s32.totalorder %s19, 1
    %p42 = por %p40, %p41
    %p44 = scmp.ne.s32.totalorder %s27, %s43
    %p45 = scmp.eq.s32.totalorder %s19, 0
    %p46 = por %p44, %p45
    %s48 = sadd.s32 %s47, 1
    %p51 = scmp.eq.s32.totalorder %s13, 1
    %p52 = scmp.ne.s32.totalorder %s47, %s49
    %p53 = scmp.eq.s32.totalorder %s13, 0
    %p54 = por %p52, %p53
    %p55 = scmp.ne.s32.totalorder %s47, %s49
    %p56 = scmp.eq.s32.totalorder %s18, 1
    %p57 = por %p55, %p56
    %p58 = scmp.ne.s32.totalorder %s49, %s50
    %p59 = scmp.eq.s32.totalorder %s18, 0
    %p60 = por %p58, %p59
    %p61 = scmp.ne.s32.totalorder %s49, %s50
    %p62 = scmp.eq.s32.totalorder %s19, 1
    %p63 = por %p61, %p62
    %p65 = scmp.ne.s32.totalorder %s50, %s64
    %p66 = scmp.eq.s32.totalorder %s19, 0
    %p67 = por %p65, %p66
    %s69 = sadd.s32 %s68, 1
    %p72 = scmp.eq.s32.totalorder %s13, 1
    %p73 = scmp.ne.s32.totalorder %s68, %s70
    %p74 = scmp.eq.s32.totalorder %s13, 0
    %p75 = por %p73, %p74
    %p76 = scmp.ne.s32.totalorder %s68, %s70
    %p77 = scmp.eq.s32.totalorder %s18, 1
    %p78 = por %p76, %p77
    %p79 = scmp.ne.s32.totalorder %s70, %s71
    %p80 = scmp.eq.s32.totalorder %s18, 0
    %p81 = por %p79, %p80
    %p82 = scmp.ne.s32.totalorder %s70, %s71
    %p83 = scmp.eq.s32.totalorder %s19, 1
    %p84 = por %p82, %p83
    %p86 = scmp.ne.s32.totalorder %s71, %s85
    %p87 = scmp.eq.s32.totalorder %s19, 0
    %p88 = por %p86, %p87
    %s90 = sadd.s32 %s89, 1
    %p93 = scmp.eq.s32.totalorder %s13, 1
    %p94 = scmp.ne.s32.totalorder %s89, %s91
    %p95 = scmp.eq.s32.totalorder %s13, 0
    %p96 = por %p94, %p95
    %p97 = scmp.ne.s32.totalorder %s89, %s91
    %p98 = scmp.eq.s32.totalorder %s18, 1
    %p99 = por %p97, %p98
    %p100 = scmp.ne.s32.totalorder %s91, %s92
    %p101 = scmp.eq.s32.totalorder %s18, 0
    %p102 = por %p100, %p101
    %p103 = scmp.ne.s32.totalorder %s91, %s92
    %p104 = scmp.eq.s32.totalorder %s19, 1
    %p105 = por %p103, %p104
    %p107 = scmp.ne.s32.totalorder %s92, %s106
    %p108 = scmp.eq.s32.totalorder %s19, 0
    %p109 = por %p107, %p108
    %s111 = sadd.s32 %s110, 1
    %p114 = scmp.eq.s32.totalorder %s13, 1
    %p115 = scmp.ne.s32.totalorder %s110, %s112
    %p116 = scmp.eq.s32.totalorder %s13, 0
    %p117 = por %p115, %p116
    %p118 = scmp.ne.s32.totalorder %s110, %s112
    %p119 = scmp.eq.s32.totalorder %s18, 1
    %p120 = por %p118, %p119
    %p121 = scmp.ne.s32.totalorder %s112, %s113
    %p122 = scmp.eq.s32.totalorder %s18, 0
    %p123 = por %p121, %p122
    %p124 = scmp.ne.s32.totalorder %s112, %s113
    %p125 = scmp.eq.s32.totalorder %s19, 1
    %p126 = por %p124, %p125
    %p128 = scmp.ne.s32.totalorder %s113, %s127
    %p129 = scmp.eq.s32.totalorder %s19, 0
    %p130 = por %p128, %p129
    %s132 = sadd.s32 %s131, 1
    %p135 = scmp.eq.s32.totalorder %s13, 1
    %p136 = scmp.ne.s32.totalorder %s131, %s133
    %p137 = scmp.eq.s32.totalorder %s13, 0
    %p138 = por %p136, %p137
    %p139 = scmp.ne.s32.totalorder %s131, %s133
    %p140 = scmp.eq.s32.totalorder %s18, 1
    %p141 = por %p139, %p140
    %p142 = scmp.ne.s32.totalorder %s133, %s134
    %p143 = scmp.eq.s32.totalorder %s18, 0
    %p144 = por %p142, %p143
    %p145 = scmp.ne.s32.totalorder %s133, %s134
    %p146 = scmp.eq.s32.totalorder %s19, 1
    %p147 = por %p145, %p146
    %p149 = scmp.ne.s32.totalorder %s134, %s148
    %p150 = scmp.eq.s32.totalorder %s19, 0
    %p151 = por %p149, %p150
    %s153 = sadd.s32 %s152, 1
    %p156 = scmp.eq.s32.totalorder %s13, 1
    %p157 = scmp.ne.s32.totalorder %s152, %s154
    %p158 = scmp.eq.s32.totalorder %s13, 0
    %p159 = por %p157, %p158
    %p160 = scmp.ne.s32.totalorder %s152, %s154
    %p161 = scmp.eq.s32.totalorder %s18, 1
    %p162 = por %p160, %p161
    %p163 = scmp.ne.s32.totalorder %s154, %s155
    %p164 = scmp.eq.s32.totalorder %s18, 0
    %p165 = por %p163, %p164
    %p166 = scmp.ne.s32.totalorder %s154, %s155
    %p167 = scmp.eq.s32.totalorder %s19, 1
    %p168 = por %p166, %p167
    %p170 = scmp.ne.s32.totalorder %s155, %s169
    %p171 = scmp.eq.s32.totalorder %s19, 0
    %p172 = por %p170, %p171
    %s173 = ssub.s32 %s13, %s20
    %p174 = scmp.eq.s32.totalorder %s173, 0
    %s176 = sadd.s32 %s175, 1
    %s177 = scalar_select %p174, %s175, %s176
    %p180 = pneg %p174
    %p181 = scmp.eq.s32.totalorder %s13, 1
    %p182 = por %p180, %p181
    %p183 = scmp.ne.s32.totalorder %s175, %s178
    %p184 = scmp.eq.s32.totalorder %s13, 0
    %p185 = por %p183, %p184
    %p186 = scmp.ne.s32.totalorder %s175, %s178
    %p187 = scmp.eq.s32.totalorder %s18, 1
    %p188 = por %p186, %p187
    %p189 = scmp.ne.s32.totalorder %s178, %s179
    %p190 = scmp.eq.s32.totalorder %s18, 0
    %p191 = por %p189, %p190
    %p192 = scmp.ne.s32.totalorder %s178, %s179
    %p193 = scmp.eq.s32.totalorder %s19, 1
    %p194 = por %p192, %p193
    %p196 = scmp.ne.s32.totalorder %s179, %s195
    %p197 = scmp.eq.s32.totalorder %s19, 0
    %p198 = por %p196, %p197
    %p199 = scmp.le.s32.totalorder 1, %s13
    %p200 = scmp.lt.s32.totalorder %s13, 3
    %p201 = pnand %p199, %p200
    %p202 = pneg %p201
    // Predicated region
    $region9: #{net_forward.5} parent=5 // pred_check
      _
    $region10: #{net_forward.5} parent=5 // pred_check_branch
      %204 = sbr.rel (%p201) target = $region12
    $region11: #{net_forward.5} parent=5 // pred_region
      %s205 = ssub.s32 %s13, 1
      // Predicated region
      $region13: #{net_forward.5} parent=11 // pred_check
        %p206 = pneg %p60
      $region14: #{net_forward.5} parent=11 // pred_check_branch
        %208 = sbr.rel (%p206) target = $region16
      $region15: #{net_forward.5} parent=11 // pred_region
        _
      $region16: #{net_forward.5} parent=11 // pred_fallthru
        _
      // Predicated region
      $region17: #{net_forward.5} parent=11 // pred_check
        %p209 = pneg %p81
      $region18: #{net_forward.5} parent=11 // pred_check_branch
        %211 = sbr.rel (%p209) target = $region20
      $region19: #{net_forward.5} parent=11 // pred_region
        _
      $region20: #{net_forward.5} parent=11 // pred_fallthru
        _
      // Predicated region
      $region21: #{net_forward.5} parent=11 // pred_check
        %p212 = pneg %p102
      $region22: #{net_forward.5} parent=11 // pred_check_branch
        %214 = sbr.rel (%p212) target = $region24
      $region23: #{net_forward.5} parent=11 // pred_region
        _
      $region24: #{net_forward.5} parent=11 // pred_fallthru
        _
      // Predicated region
      $region25: #{net_forward.5} parent=11 // pred_check
        %p215 = pneg %p123
      $region26: #{net_forward.5} parent=11 // pred_check_branch
        %217 = sbr.rel (%p215) target = $region28
      $region27: #{net_forward.5} parent=11 // pred_region
        _
      $region28: #{net_forward.5} parent=11 // pred_fallthru
        _
      // Predicated region
      $region29: #{net_forward.5} parent=11 // pred_check
        %p218 = pneg %p144
      $region30: #{net_forward.5} parent=11 // pred_check_branch
        %220 = sbr.rel (%p218) target = $region32
      $region31: #{net_forward.5} parent=11 // pred_region
        _
      $region32: #{net_forward.5} parent=11 // pred_fallthru
        _
      // Predicated region
      $region33: #{net_forward.5} parent=11 // pred_check
        %p221 = pneg %p165
      $region34: #{net_forward.5} parent=11 // pred_check_branch
        %223 = sbr.rel (%p221) target = $region36
      $region35: #{net_forward.5} parent=11 // pred_region
        _
      $region36: #{net_forward.5} parent=11 // pred_fallthru
        _
    $region12: #{net_forward.5} parent=5 // pred_fallthru
      _
    %p224 = scmp.lt.s32.totalorder %s13, 2
    // Predicated region
    $region37: #{net_forward.5} parent=5 // pred_check
      %p225 = pneg %p224
    $region38: #{net_forward.5} parent=5 // pred_check_branch
      %227 = sbr.rel (%p225) target = $region40
    $region39: #{net_forward.5} parent=5 // pred_region
      // Predicated region
      $region41: #{net_forward.5} parent=39 // pred_check
        %p228 = pneg %p33
      $region42: #{net_forward.5} parent=39 // pred_check_branch
        %230 = sbr.rel (%p228) target = $region44
      $region43: #{net_forward.5} parent=39 // pred_region
        %s231 = smul.u32 2, %s13
        %p232 = scmp.lt.s32.totalorder %s231, 3
        %s233 = scalar_select %p232, %s231, 3
        %s234 = smul.addr %s233, 2
        %s235 = smul.addr %s234, 4
        %s236 = scalar_lea.vmem %s0, %s235
        %s237 = smul.u32 2, %s13
      $region44: #{net_forward.5} parent=39 // pred_fallthru
        _
    $region40: #{net_forward.5} parent=5 // pred_fallthru
      _
    %p238 = scmp.le.s32.totalorder 1, %s13
    %p239 = scmp.lt.s32.totalorder %s13, 3
    %p240 = pnand %p238, %p239
    %p241 = pneg %p240
    // Predicated region
    $region45: #{net_forward.5} parent=5 // pred_check
      _
    $region46: #{net_forward.5} parent=5 // pred_check_branch
      %243 = sbr.rel (%p240) target = $region48
    $region47: #{net_forward.5} parent=5 // pred_region
      %s244 = ssub.s32 %s13, 1
      %s245 = smul.u32 2, %s18
      %p246 = scmp.lt.s32.totalorder %s245, 3
      %s247 = scalar_select %p246, %s245, 3
      %s248 = smul.addr %s247, 2
      %s249 = smul.addr %s248, 4
      %s250 = scalar_lea.vmem %s0, %s249
      %p251 = pneg %p39
      %p252 = pneg %p36
      %p253 = pneg %p60
      %p254 = pneg %p57
      %p255 = pneg %p81
      %p256 = pneg %p78
      %p257 = pneg %p102
      %p258 = pneg %p99
      %p259 = pneg %p123
      %p260 = pneg %p120
      %p261 = pneg %p144
      %p262 = pneg %p141
      %p263 = pneg %p165
      %p264 = pneg %p162
      %p265 = pneg %p191
      %p266 = pneg %p188
      %s267 = smul.u32 2, %s18
      %p268 = scmp.lt.s32.totalorder %s267, 3
      %s269 = scalar_select %p268, %s267, 3
      %s270 = smul.addr %s269, 8
      %s271 = scalar_lea.vmem %s7, %s270
      %s272 = smul.u32 2, %s18
      %p273 = scmp.lt.s32.totalorder %s272, 3
      %s274 = scalar_select %p273, %s272, 3
      %s275 = smul.addr %s274, 2
      %s276 = smul.addr %s275, 4
      %s277 = scalar_lea.vmem %s0, %s276
      %s278 = smul.u32 2, %s18
      %s279 = smul.u32 2, %s18
      %p280 = scmp.lt.s32.totalorder %s279, 3
      %s281 = scalar_select %p280, %s279, 3
      %s282 = smul.addr %s281, 8
      %s283 = scalar_lea.vmem %s7, %s282
      %s284 = smul.u32 2, %s18
      %v285 = vld [vmem:[%s277] sm:$0xff]
      %v286 = vld [vmem:[%s277 + $0x8] sm:$0xff]
      %v287 = vld [vmem:[%s1] sm:$0xf]
      %v288 = vld [vmem:[%s1 + $0x4] sm:$0xf]
      %v289 = vld [vmem:[%s1 + $0x8] sm:$0xf]
      %v290 = vld [vmem:[%s1 + $0xc] sm:$0xf]
      %v291 = vld [vmem:[%s1 + $0x10] sm:$0xf]
      %v292 = vld [vmem:[%s1 + $0x14] sm:$0xf]
      %v293 = vld [vmem:[%s1 + $0x18] sm:$0xf]
      %v294 = vld [vmem:[%s1 + $0x1c] sm:$0xf]
      %v295 = vld [vmem:[%s1 + $0x20] sm:$0xf]
      %v296 = vld [vmem:[%s1 + $0x24] sm:$0xf]
      %v297 = vld [vmem:[%s1 + $0x28] sm:$0xf]
      %v298 = vld [vmem:[%s1 + $0x2c] sm:$0xf]
      %v299 = vld [vmem:[%s1 + $0x30] sm:$0xf]
      %v300 = vld [vmem:[%s1 + $0x34] sm:$0xf]
      %v301 = vld [vmem:[%s1 + $0x38] sm:$0xf]
      %v302 = vld [vmem:[%s1 + $0x3c] sm:$0xf]
      %v303 = vld [vmem:[%s1 + $0x40] sm:$0xf]
      %v304 = vld [vmem:[%s1 + $0x44] sm:$0xf]
      %v305 = vld [vmem:[%s1 + $0x48] sm:$0xf]
      %v306 = vld [vmem:[%s1 + $0x4c] sm:$0xf]
      %v307 = vld [vmem:[%s1 + $0x50] sm:$0xf]
      %v308 = vld [vmem:[%s1 + $0x54] sm:$0xf]
      %v309 = vld [vmem:[%s1 + $0x58] sm:$0xf]
      %v310 = vld [vmem:[%s1 + $0x5c] sm:$0xf]
      %v311 = vld [vmem:[%s1 + $0x60] sm:$0xf]
      %v312 = vld [vmem:[%s1 + $0x64] sm:$0xf]
      %v313 = vld [vmem:[%s1 + $0x68] sm:$0xf]
      %v314 = vld [vmem:[%s1 + $0x6c] sm:$0xf]
      %v315 = vld [vmem:[%s1 + $0x70] sm:$0xf]
      %v316 = vld [vmem:[%s1 + $0x74] sm:$0xf]
      %v317 = vld [vmem:[%s1 + $0x78] sm:$0xf]
      %v318 = vld [vmem:[%s1 + $0x7c] sm:$0xf]
      %v319 = vld [vmem:[%s2] sm:$0x1]
      %v321 = vperm.slane %v319, 0
      %v325 = vunpack.c.l.b16 %v285
      %v326 = vunpack.c.h.b16 %v285
      %v327 = vunpack.c.l.b16 %v286
      %v328 = vunpack.c.h.b16 %v286
      %v329 = vpack.c.b16 %v327, %v325
      %v330 = vpack.c.b16 %v328, %v326
      %v365 = vunpack.c.l.b16 %v287
      %v366 = vunpack.c.l.b16 %v288
      %v367 = vunpack.c.l.b16 %v289
      %v368 = vunpack.c.l.b16 %v290
      %v369 = vunpack.c.l.b16 %v291
      %v370 = vunpack.c.l.b16 %v292
      %v371 = vunpack.c.l.b16 %v293
      %v372 = vunpack.c.l.b16 %v294
      %v373 = vunpack.c.l.b16 %v295
      %v374 = vunpack.c.l.b16 %v296
      %v375 = vunpack.c.l.b16 %v297
      %v376 = vunpack.c.l.b16 %v298
      %v377 = vunpack.c.l.b16 %v299
      %v378 = vunpack.c.l.b16 %v300
      %v379 = vunpack.c.l.b16 %v301
      %v380 = vunpack.c.l.b16 %v302
      %v381 = vunpack.c.l.b16 %v303
      %v382 = vunpack.c.l.b16 %v304
      %v383 = vunpack.c.l.b16 %v305
      %v384 = vunpack.c.l.b16 %v306
      %v385 = vunpack.c.l.b16 %v307
      %v386 = vunpack.c.l.b16 %v308
      %v387 = vunpack.c.l.b16 %v309
      %v388 = vunpack.c.l.b16 %v310
      %v389 = vunpack.c.l.b16 %v311
      %v390 = vunpack.c.l.b16 %v312
      %v391 = vunpack.c.l.b16 %v313
      %v392 = vunpack.c.l.b16 %v314
      %v393 = vunpack.c.l.b16 %v315
      %v394 = vunpack.c.l.b16 %v316
      %v395 = vunpack.c.l.b16 %v317
      %v396 = vunpack.c.l.b16 %v318
      %v397 = vpack.c.b16 %v366, %v365
      %v398 = vpack.c.b16 %v368, %v367
      %v399 = vpack.c.b16 %v370, %v369
      %v400 = vpack.c.b16 %v372, %v371
      %v401 = vpack.c.b16 %v374, %v373
      %v402 = vpack.c.b16 %v376, %v375
      %v403 = vpack.c.b16 %v378, %v377
      %v404 = vpack.c.b16 %v380, %v379
      %v405 = vpack.c.b16 %v382, %v381
      %v406 = vpack.c.b16 %v384, %v383
      %v407 = vpack.c.b16 %v386, %v385
      %v408 = vpack.c.b16 %v388, %v387
      %v409 = vpack.c.b16 %v390, %v389
      %v410 = vpack.c.b16 %v392, %v391
      %v411 = vpack.c.b16 %v394, %v393
      %v412 = vpack.c.b16 %v396, %v395
      %429 = vmatpush.bf16.msra.mxu0 %v404
      %430 = vmatpush.bf16.msra.mxu0 %v403
      %431 = vmatpush.bf16.msra.mxu0 %v402
      %432 = vmatpush.bf16.msra.mxu0 %v401
      %433 = vmatpush.bf16.msra.mxu0 %v400
      %434 = vmatpush.bf16.msra.mxu0 %v399
      %435 = vmatpush.bf16.msra.mxu0 %v398
      %436 = vmatpush.bf16.msra.mxu0 %v397
      %437 = vmatmul.bf16.gmra.mxu0 %v329
      %v438 = vpop.f32.mrf.mxu0
      %v439 = vadd.f32 %v321, %v438
      %v440 = vpop.f32.mrf.mxu0
      %v441 = vadd.f32 %v321, %v440
      %442 = vdwg.mxu0
      %443 = vmatpush.bf16.msra.mxu0 %v412
      %444 = vmatpush.bf16.msra.mxu0 %v411
      %445 = vmatpush.bf16.msra.mxu0 %v410
      %446 = vmatpush.bf16.msra.mxu0 %v409
      %447 = vmatpush.bf16.msra.mxu0 %v408
      %448 = vmatpush.bf16.msra.mxu0 %v407
      %449 = vmatpush.bf16.msra.mxu0 %v406
      %450 = vmatpush.bf16.msra.mxu0 %v405
      %451 = vmatmul.bf16.gmra.mxu0 %v330
      %v452 = vpop.f32.mrf.mxu0
      %v453 = vadd.f32 %v439, %v452
      %v454 = vpop.f32.mrf.mxu0
      %v455 = vadd.f32 %v441, %v454
      %456 = vdwg.mxu0
      %v457 = vmax.f32 %v453, 0.0
      %v458 = vmax.f32 %v455, 0.0
      %v459 = vpack.c.bf16 %v458, %v457
      %v460 = vld [vmem:[%s3] sm:$0xf]
      %v461 = vld [vmem:[%s3 + $0x4] sm:$0xf]
      %v462 = vld [vmem:[%s3 + $0x8] sm:$0xf]
      %v463 = vld [vmem:[%s3 + $0xc] sm:$0xf]
      %v464 = vld [vmem:[%s3 + $0x10] sm:$0xf]
      %v465 = vld [vmem:[%s3 + $0x14] sm:$0xf]
      %v466 = vld [vmem:[%s3 + $0x18] sm:$0xf]
      %v467 = vld [vmem:[%s3 + $0x1c] sm:$0xf]
      %v468 = vld [vmem:[%s3 + $0x20] sm:$0xf]
      %v469 = vld [vmem:[%s3 + $0x24] sm:$0xf]
      %v470 = vld [vmem:[%s3 + $0x28] sm:$0xf]
      %v471 = vld [vmem:[%s3 + $0x2c] sm:$0xf]
      %v472 = vld [vmem:[%s3 + $0x30] sm:$0xf]
      %v473 = vld [vmem:[%s3 + $0x34] sm:$0xf]
      %v474 = vld [vmem:[%s3 + $0x38] sm:$0xf]
      %v475 = vld [vmem:[%s3 + $0x3c] sm:$0xf]
      %v476 = vld [vmem:[%s4] sm:$0x1]
      %v478 = vperm.slane %v476, 0
      %v496 = vunpack.c.l.b16 %v460
      %v497 = vunpack.c.l.b16 %v461
      %v498 = vunpack.c.l.b16 %v462
      %v499 = vunpack.c.l.b16 %v463
      %v500 = vunpack.c.l.b16 %v464
      %v501 = vunpack.c.l.b16 %v465
      %v502 = vunpack.c.l.b16 %v466
      %v503 = vunpack.c.l.b16 %v467
      %v504 = vunpack.c.l.b16 %v468
      %v505 = vunpack.c.l.b16 %v469
      %v506 = vunpack.c.l.b16 %v470
      %v507 = vunpack.c.l.b16 %v471
      %v508 = vunpack.c.l.b16 %v472
      %v509 = vunpack.c.l.b16 %v473
      %v510 = vunpack.c.l.b16 %v474
      %v511 = vunpack.c.l.b16 %v475
      %v512 = vpack.c.b16 %v497, %v496
      %v513 = vpack.c.b16 %v499, %v498
      %v514 = vpack.c.b16 %v501, %v500
      %v515 = vpack.c.b16 %v503, %v502
      %v516 = vpack.c.b16 %v505, %v504
      %v517 = vpack.c.b16 %v507, %v506
      %v518 = vpack.c.b16 %v509, %v508
      %v519 = vpack.c.b16 %v511, %v510
      %528 = vmatpush.bf16.msra.mxu0 %v519
      %529 = vmatpush.bf16.msra.mxu0 %v518
      %530 = vmatpush.bf16.msra.mxu0 %v517
      %531 = vmatpush.bf16.msra.mxu0 %v516
      %532 = vmatpush.bf16.msra.mxu0 %v515
      %533 = vmatpush.bf16.msra.mxu0 %v514
      %534 = vmatpush.bf16.msra.mxu0 %v513
      %535 = vmatpush.bf16.msra.mxu0 %v512
      %536 = vmatmul.bf16.gmra.mxu0 %v459
      %v537 = vpop.f32.mrf.mxu0
      %v538 = vadd.f32 %v478, %v537
      %v539 = vpop.f32.mrf.mxu0
      %v540 = vadd.f32 %v478, %v539
      %541 = vdwg.mxu0
      %v542 = vmax.f32 %v538, 0.0
      %v543 = vmax.f32 %v540, 0.0
      %v544 = vpack.c.bf16 %v543, %v542
      %v545 = vld [vmem:[%s5] sm:$0xf]
      %v546 = vld [vmem:[%s5 + $0x4] sm:$0xf]
      %v547 = vld [vmem:[%s5 + $0x8] sm:$0xf]
      %v548 = vld [vmem:[%s5 + $0xc] sm:$0xf]
      %v549 = vld [vmem:[%s5 + $0x10] sm:$0xf]
      %v550 = vld [vmem:[%s5 + $0x14] sm:$0xf]
      %v551 = vld [vmem:[%s5 + $0x18] sm:$0xf]
      %v552 = vld [vmem:[%s5 + $0x1c] sm:$0xf]
      %v553 = vld [vmem:[%s5 + $0x20] sm:$0xf]
      %v554 = vld [vmem:[%s5 + $0x24] sm:$0xf]
      %v555 = vld [vmem:[%s5 + $0x28] sm:$0xf]
      %v556 = vld [vmem:[%s5 + $0x2c] sm:$0xf]
      %v557 = vld [vmem:[%s5 + $0x30] sm:$0xf]
      %v558 = vld [vmem:[%s5 + $0x34] sm:$0xf]
      %v559 = vld [vmem:[%s5 + $0x38] sm:$0xf]
      %v560 = vld [vmem:[%s5 + $0x3c] sm:$0xf]
      %v561 = vld [vmem:[%s6] sm:$0x1]
      %v563 = vperm.slane %v561, 0
      %v581 = vunpack.c.l.b16 %v545
      %v582 = vunpack.c.l.b16 %v546
      %v583 = vunpack.c.l.b16 %v547
      %v584 = vunpack.c.l.b16 %v548
      %v585 = vunpack.c.l.b16 %v549
      %v586 = vunpack.c.l.b16 %v550
      %v587 = vunpack.c.l.b16 %v551
      %v588 = vunpack.c.l.b16 %v552
      %v589 = vunpack.c.l.b16 %v553
      %v590 = vunpack.c.l.b16 %v554
      %v591 = vunpack.c.l.b16 %v555
      %v592 = vunpack.c.l.b16 %v556
      %v593 = vunpack.c.l.b16 %v557
      %v594 = vunpack.c.l.b16 %v558
      %v595 = vunpack.c.l.b16 %v559
      %v596 = vunpack.c.l.b16 %v560
      %v597 = vpack.c.b16 %v582, %v581
      %v598 = vpack.c.b16 %v584, %v583
      %v599 = vpack.c.b16 %v586, %v585
      %v600 = vpack.c.b16 %v588, %v587
      %v601 = vpack.c.b16 %v590, %v589
      %v602 = vpack.c.b16 %v592, %v591
      %v603 = vpack.c.b16 %v594, %v593
      %v604 = vpack.c.b16 %v596, %v595
      %613 = vmatpush.bf16.msra.mxu0 %v604
      %614 = vmatpush.bf16.msra.mxu0 %v603
      %615 = vmatpush.bf16.msra.mxu0 %v602
      %616 = vmatpush.bf16.msra.mxu0 %v601
      %617 = vmatpush.bf16.msra.mxu0 %v600
      %618 = vmatpush.bf16.msra.mxu0 %v599
      %619 = vmatpush.bf16.msra.mxu0 %v598
      %620 = vmatpush.bf16.msra.mxu0 %v597
      %621 = vmatmul.bf16.gmra.mxu0 %v544
      %v622 = vpop.f32.mrf.mxu0
      %v623 = vadd.f32 %v563, %v622
      %v624 = vpop.f32.mrf.mxu0
      %v625 = vadd.f32 %v563, %v624
      %626 = vdwg.mxu0
      %vm627 = vcmask 130048
      %628 = vst.msk [vmem:[%s283] sm:$0xff] %vm627, %v623
      %629 = vst.msk [vmem:[%s283 + $0x8] sm:$0xff] %vm627, %v625
      %s630 = smul.u32 2, %s18
      %p631 = scmp.lt.s32.totalorder %s630, 3
      %s632 = scalar_select %p631, %s630, 3
      %s633 = smul.addr %s632, 8
      %s634 = scalar_lea.vmem %s7, %s633
      // Predicated region
      $region49: #{net_forward.5} parent=47 // pred_check
        %p635 = pneg %p188
      $region50: #{net_forward.5} parent=47 // pred_check_branch
        %637 = sbr.rel (%p635) target = $region52
      $region51: #{net_forward.5} parent=47 // pred_region
        %s638 = smul.u32 2, %s18
      $region52: #{net_forward.5} parent=47 // pred_fallthru
        _
    $region48: #{net_forward.5} parent=5 // pred_fallthru
      _
    %p639 = scmp.le.s32.totalorder 2, %s13
    // Predicated region
    $region53: #{net_forward.5} parent=5 // pred_check
      %p640 = pneg %p639
    $region54: #{net_forward.5} parent=5 // pred_check_branch
      %642 = sbr.rel (%p640) target = $region56
    $region55: #{net_forward.5} parent=5 // pred_region
      %s643 = ssub.s32 %s13, 2
      // Predicated region
      $region57: #{net_forward.5} parent=55 // pred_check
        %p644 = pneg %p194
      $region58: #{net_forward.5} parent=55 // pred_check_branch
        %646 = sbr.rel (%p644) target = $region60
      $region59: #{net_forward.5} parent=55 // pred_region
        %s647 = smul.u32 2, %s19
        %p648 = scmp.lt.s32.totalorder %s647, 3
        %s649 = scalar_select %p648, %s647, 3
        %s650 = smul.addr %s649, 8
        %s651 = scalar_lea.vmem %s7, %s650
      $region60: #{net_forward.5} parent=55 // pred_fallthru
        _
    $region56: #{net_forward.5} parent=5 // pred_fallthru
      _
  $region6: #{net_forward.5} parent=0 // loop_footer
    %s17 = sadd.s32 1, %s13
  $region7: #{net_forward.5} parent=0 // loop_footer_branch
    %12 = sbr.rel target = $region3
  $region8: #{net_forward.5} parent=0 // loop_exit
    _

</llo_original>
